<compile_context>
chip_gen: v7x
topology: tpu7x:2x2x1
jax: 0.10.0
libtpu: 0.0.40
codegen_flags: <defaults>
</compile_context>

<pallas_src>
import functools

import jax
import jax.numpy as jnp
from jax.experimental import pallas as pl
from jax.experimental.pallas import tpu as pltpu


def _convlstm_kernel(patch_ref, cell_ref, w_ref, out_ref, *, hidden):
    """One (batch-tile, spatial-tile) block per grid step.

    patch_ref : (Bt, Kp, NT)   im2col patches (+ ones row for bias, K zero-padded)
    cell_ref  : (Bt, Hd, NT)   previous cell state, channels-major
    w_ref     : (4*Hd, Kp)     conv weights with bias folded in as a column
    out_ref   : (Bt, 2*Hd, NT) concat(h_t, c_t) along the channel (sublane) dim
    """
    Hd = hidden
    w = w_ref[...]
    Bt = patch_ref.shape[0]

    def sigm(v):  # sigmoid(x) = 0.5*tanh(0.5*x) + 0.5  -> single EUP op
        return 0.5 * jnp.tanh(0.5 * v) + 0.5

    for b in range(Bt):  # static unroll over the batch tile
        # Single deep-K MXU matmul; bias already folded in via ones-row.
        acc = jnp.dot(w, patch_ref[b], preferred_element_type=jnp.float32)  # (4Hd, NT)

        # Sublane-aligned gate slices (offsets are multiples of 8 for Hd=32).
        xh_i = acc[0 * Hd:1 * Hd]
        xh_f = acc[1 * Hd:2 * Hd]
        xh_o = acc[2 * Hd:3 * Hd]
        xh_c = acc[3 * Hd:4 * Hd]

        cell = cell_ref[b].astype(jnp.float32)
        c_t = sigm(xh_f) * cell + sigm(xh_i) * jnp.tanh(xh_c)
        h_t = sigm(xh_o) * jnp.tanh(c_t)

        # Direct lane-dense, unmasked stores (no concatenate).
        out_ref[b, :Hd, :] = h_t.astype(out_ref.dtype)
        out_ref[b, Hd:, :] = c_t.astype(out_ref.dtype)


def conv_lstm_layer(x, weight, bias, *, in_channels, hidden_channels,
                    batch_tile=None, spatial_tile=None):
    """Pallas equivalent of ConvLSTMLayer.forward.

    x      : (B, in_channels + 2*hidden_channels, H, W)   NCHW, like PyTorch
    weight : (4*hidden_channels, in_channels + hidden_channels, 3, 3)  OIHW
    bias   : (4*hidden_channels,)
    returns: (B, 2*hidden_channels, H, W) = cat(h_t, c_t) on channel dim.
    """
    B, C, H, W = x.shape
    Hd = hidden_channels
    Cxh = in_channels + Hd
    assert C == in_channels + 2 * Hd
    HW = H * W

    xh = x[:, :Cxh]                              # x || hidden
    cell = x[:, Cxh:].reshape(B, Hd, HW)         # cell state, channels-major (no transpose)

    # --- im2col (layout plumbing, done once by XLA in the wrapper) ---------
    # patch[b, (ky*3+kx)*Cxh + c, h*W + w] = xh_pad[b, c, h+ky, w+kx]
    xh_pad = jnp.pad(xh, ((0, 0), (0, 0), (1, 1), (1, 1)))
    taps = [xh_pad[:, :, ky:ky + H, kx:kx + W]
            for ky in range(3) for kx in range(3)]
    patch = jnp.concatenate(taps, axis=1).reshape(B, 9 * Cxh, HW)
    # Fold the bias into the matmul: append a ones row to the patch ...
    patch = jnp.concatenate(
        [patch, jnp.ones((B, 1, HW), dtype=patch.dtype)], axis=1)
    K = 9 * Cxh + 1
    Kp = ((K + 127) // 128) * 128                # lane/sublane-friendly K
    patch = jnp.pad(patch, ((0, 0), (0, Kp - K), (0, 0)))

    # ... and the bias as an extra weight column.  OIHW -> (4*Hd, 9*Cxh).
    w_mat = jnp.transpose(weight, (0, 2, 3, 1)).reshape(4 * Hd, 9 * Cxh)
    w_full = jnp.concatenate([w_mat, bias[:, None]], axis=1)
    w_full = jnp.pad(w_full, ((0, 0), (0, Kp - K)))

    # --- tile sizes --------------------------------------------------------
    if spatial_tile is None:
        if HW <= 2048:
            spatial_tile = HW
        else:
            spatial_tile = HW
            for cand in (2048, 1024, 512, 256, 128):
                if HW % cand == 0:
                    spatial_tile = cand
                    break
    NT = spatial_tile
    assert HW % NT == 0

    if batch_tile is None:
        # double-buffered in/out block bytes must stay well under VMEM
        def blk_bytes(bt):
            return 2 * bt * (Kp + Hd + 2 * Hd) * NT * 4
        batch_tile = 1
        for cand in (8, 4, 2, 1):
            if B % cand == 0 and blk_bytes(cand) < 24 * 1024 * 1024:
                batch_tile = cand
                break
    Bt = batch_tile
    assert B % Bt == 0

    kernel = functools.partial(_convlstm_kernel, hidden=Hd)

    out_flat = pl.pallas_call(
        kernel,
        out_shape=jax.ShapeDtypeStruct((B, 2 * Hd, HW), x.dtype),
        grid=(B // Bt, HW // NT),
        in_specs=[
            pl.BlockSpec((Bt, Kp, NT), lambda bi, ni: (bi, 0, ni)),
            pl.BlockSpec((Bt, Hd, NT), lambda bi, ni: (bi, 0, ni)),
            pl.BlockSpec((4 * Hd, Kp), lambda bi, ni: (0, 0)),
        ],
        out_specs=pl.BlockSpec((Bt, 2 * Hd, NT), lambda bi, ni: (bi, 0, ni)),
        compiler_params=pltpu.CompilerParams(
            dimension_semantics=("parallel", "parallel"),
            vmem_limit_bytes=32 * 1024 * 1024,
        ),
    )(patch, cell, w_full)

    # channels-major output reshapes straight back to NCHW (no transpose).
    return out_flat.reshape(B, 2 * Hd, H, W)


def conv_lstm_layer_ref(x, weight, bias, *, in_channels, hidden_channels):
    """Plain-JAX reference matching the PyTorch forward exactly."""
    Cxh = in_channels + hidden_channels
    Hd = hidden_channels
    xh = x[:, :Cxh]
    cell = x[:, Cxh:]
    conv = jax.lax.conv_general_dilated(
        xh, weight, window_strides=(1, 1), padding=((1, 1), (1, 1)),
        dimension_numbers=("NCHW", "OIHW", "NCHW"),
    ) + bias[None, :, None, None]
    xh_i = conv[:, 0 * Hd:1 * Hd]
    xh_f = conv[:, 1 * Hd:2 * Hd]
    xh_o = conv[:, 2 * Hd:3 * Hd]
    xh_c = conv[:, 3 * Hd:4 * Hd]
    c_t = jax.nn.sigmoid(xh_f) * cell + jax.nn.sigmoid(xh_i) * jnp.tanh(xh_c)
    h_t = jax.nn.sigmoid(xh_o) * jnp.tanh(c_t)
    return jnp.concatenate([h_t, c_t], axis=1)


if __name__ == "__main__":
    in_channels = 4
    hidden_channels = 32
    B, H, W = 2, 16, 16
    Cxh = in_channels + hidden_channels

    key = jax.random.PRNGKey(0)
    kx, kw, kb = jax.random.split(key, 3)

    # Input: (B, in + 2*hidden, H, W), like the PyTorch module expects.
    x = jax.random.normal(kx, (B, in_channels + 2 * hidden_channels, H, W),
                          dtype=jnp.float32)

    # Deterministic Conv2d-style init (uniform +-1/sqrt(fan_in)).
    fan_in = Cxh * 3 * 3
    bound = 1.0 / (fan_in ** 0.5)
    weight = jax.random.uniform(kw, (4 * hidden_channels, Cxh, 3, 3),
                                dtype=jnp.float32, minval=-bound, maxval=bound)
    bias = jax.random.uniform(kb, (4 * hidden_channels,),
                              dtype=jnp.float32, minval=-bound, maxval=bound)

    out = conv_lstm_layer(x, weight, bias,
                          in_channels=in_channels,
                          hidden_channels=hidden_channels)
    out = jax.block_until_ready(out)

    ref = conv_lstm_layer_ref(x, weight, bias,
                              in_channels=in_channels,
                              hidden_channels=hidden_channels)
    ref = jax.block_until_ready(ref)

    assert out.shape == (B, 2 * hidden_channels, H, W)
    assert jnp.allclose(out, ref, atol=1e-4, rtol=1e-4), \
        float(jnp.max(jnp.abs(out - ref)))

    print("KERNEL_OK")
</pallas_src>

<mosaic_0001>
module attributes {stable_mosaic.version = 11 : i64} {
  func.func @_convlstm_kernel(%arg0: i32, %arg1: i32, %arg2: memref<2x384x256xf32, #tpu.memory_space<vmem>>, %arg3: memref<2x32x256xf32, #tpu.memory_space<vmem>>, %arg4: memref<128x384xf32, #tpu.memory_space<vmem>>, %arg5: memref<2x64x256xf32, #tpu.memory_space<vmem>>) attributes {dimension_semantics = [#tpu.dimension_semantics<parallel>, #tpu.dimension_semantics<parallel>], iteration_bounds = array<i64: 1, 1>, scalar_prefetch = 0 : i64, scratch_operands = 0 : i64, tpu.core_type = #tpu.core_type<tc>, window_params = [{transform_indices = @transform_0, window_bounds = array<i64: 2, 384, 256>}, {transform_indices = @transform_1, window_bounds = array<i64: 2, 32, 256>}, {pipeline_mode = #tpu.pipeline_mode<synchronous>, transform_indices = @transform_2, window_bounds = array<i64: 128, 384>}, {transform_indices = @transform_3, window_bounds = array<i64: 2, 64, 256>}]} {
    %c0 = arith.constant 0 : index
    %c0_0 = arith.constant 0 : index
    %0 = vector.load %arg4[%c0, %c0_0] : memref<128x384xf32, #tpu.memory_space<vmem>>, vector<128x384xf32>
    %c0_1 = arith.constant 0 : index
    %c0_2 = arith.constant 0 : index
    %c0_3 = arith.constant 0 : index
    %1 = vector.load %arg2[%c0_1, %c0_2, %c0_3] : memref<2x384x256xf32, #tpu.memory_space<vmem>>, vector<1x384x256xf32>
    %2 = vector.shape_cast %1 : vector<1x384x256xf32> to vector<384x256xf32>
    %cst = arith.constant dense<0.000000e+00> : vector<128x256xf32>
    %3 = tpu.matmul %0, %2, %cst {dimension_numbers = #tpu.dot_dimension_numbers<[1], [0], [0], [1], [0, 0, 1, 1], [], []>} : vector<128x384xf32>, vector<384x256xf32>, vector<128x256xf32> -> vector<128x256xf32>
    %4 = vector.extract_strided_slice %3 {offsets = [0, 0], sizes = [32, 256], strides = [1, 1]} : vector<128x256xf32> to vector<32x256xf32>
    %5 = vector.extract_strided_slice %3 {offsets = [32, 0], sizes = [32, 256], strides = [1, 1]} : vector<128x256xf32> to vector<32x256xf32>
    %6 = vector.extract_strided_slice %3 {offsets = [64, 0], sizes = [32, 256], strides = [1, 1]} : vector<128x256xf32> to vector<32x256xf32>
    %7 = vector.extract_strided_slice %3 {offsets = [96, 0], sizes = [32, 256], strides = [1, 1]} : vector<128x256xf32> to vector<32x256xf32>
    %c0_4 = arith.constant 0 : index
    %c0_5 = arith.constant 0 : index
    %c0_6 = arith.constant 0 : index
    %8 = vector.load %arg3[%c0_4, %c0_5, %c0_6] : memref<2x32x256xf32, #tpu.memory_space<vmem>>, vector<1x32x256xf32>
    %9 = vector.shape_cast %8 : vector<1x32x256xf32> to vector<32x256xf32>
    %cst_7 = arith.constant 5.000000e-01 : f32
    %10 = vector.broadcast %cst_7 : f32 to vector<32x256xf32>
    %11 = arith.mulf %10, %5 : vector<32x256xf32>
    %12 = math.tanh %11 : vector<32x256xf32>
    %cst_8 = arith.constant 5.000000e-01 : f32
    %13 = vector.broadcast %cst_8 : f32 to vector<32x256xf32>
    %14 = arith.mulf %13, %12 : vector<32x256xf32>
    %cst_9 = arith.constant 5.000000e-01 : f32
    %15 = vector.broadcast %cst_9 : f32 to vector<32x256xf32>
    %16 = arith.addf %14, %15 : vector<32x256xf32>
    %17 = arith.mulf %16, %9 : vector<32x256xf32>
    %cst_10 = arith.constant 5.000000e-01 : f32
    %18 = vector.broadcast %cst_10 : f32 to vector<32x256xf32>
    %19 = arith.mulf %18, %4 : vector<32x256xf32>
    %20 = math.tanh %19 : vector<32x256xf32>
    %cst_11 = arith.constant 5.000000e-01 : f32
    %21 = vector.broadcast %cst_11 : f32 to vector<32x256xf32>
    %22 = arith.mulf %21, %20 : vector<32x256xf32>
    %cst_12 = arith.constant 5.000000e-01 : f32
    %23 = vector.broadcast %cst_12 : f32 to vector<32x256xf32>
    %24 = arith.addf %22, %23 : vector<32x256xf32>
    %25 = math.tanh %7 : vector<32x256xf32>
    %26 = arith.mulf %24, %25 : vector<32x256xf32>
    %27 = arith.addf %17, %26 : vector<32x256xf32>
    %cst_13 = arith.constant 5.000000e-01 : f32
    %28 = vector.broadcast %cst_13 : f32 to vector<32x256xf32>
    %29 = arith.mulf %28, %6 : vector<32x256xf32>
    %30 = math.tanh %29 : vector<32x256xf32>
    %cst_14 = arith.constant 5.000000e-01 : f32
    %31 = vector.broadcast %cst_14 : f32 to vector<32x256xf32>
    %32 = arith.mulf %31, %30 : vector<32x256xf32>
    %cst_15 = arith.constant 5.000000e-01 : f32
    %33 = vector.broadcast %cst_15 : f32 to vector<32x256xf32>
    %34 = arith.addf %32, %33 : vector<32x256xf32>
    %35 = math.tanh %27 : vector<32x256xf32>
    %36 = arith.mulf %34, %35 : vector<32x256xf32>
    %c0_16 = arith.constant 0 : index
    %c0_17 = arith.constant 0 : index
    %c0_18 = arith.constant 0 : index
    %37 = vector.load %arg5[%c0_16, %c0_17, %c0_18] : memref<2x64x256xf32, #tpu.memory_space<vmem>>, vector<1x32x256xf32>
    %38 = vector.shape_cast %37 : vector<1x32x256xf32> to vector<32x256xf32>
    %39 = vector.shape_cast %36 : vector<32x256xf32> to vector<1x32x256xf32>
    tpu.vector_store %arg5[%c0_16, %c0_17, %c0_18], %39 {strides = array<i32>} : memref<2x64x256xf32, #tpu.memory_space<vmem>>, vector<1x32x256xf32>,
    %c0_19 = arith.constant 0 : index
    %c32 = arith.constant 32 : index
    %c0_20 = arith.constant 0 : index
    %40 = vector.load %arg5[%c0_19, %c32, %c0_20] : memref<2x64x256xf32, #tpu.memory_space<vmem>>, vector<1x32x256xf32>
    %41 = vector.shape_cast %40 : vector<1x32x256xf32> to vector<32x256xf32>
    %42 = vector.shape_cast %27 : vector<32x256xf32> to vector<1x32x256xf32>
    tpu.vector_store %arg5[%c0_19, %c32, %c0_20], %42 {strides = array<i32>} : memref<2x64x256xf32, #tpu.memory_space<vmem>>, vector<1x32x256xf32>,
    %c1 = arith.constant 1 : index
    %c0_21 = arith.constant 0 : index
    %c0_22 = arith.constant 0 : index
    %43 = vector.load %arg2[%c1, %c0_21, %c0_22] : memref<2x384x256xf32, #tpu.memory_space<vmem>>, vector<1x384x256xf32>
    %44 = vector.shape_cast %43 : vector<1x384x256xf32> to vector<384x256xf32>
    %cst_23 = arith.constant dense<0.000000e+00> : vector<128x256xf32>
    %45 = tpu.matmul %0, %44, %cst_23 {dimension_numbers = #tpu.dot_dimension_numbers<[1], [0], [0], [1], [0, 0, 1, 1], [], []>} : vector<128x384xf32>, vector<384x256xf32>, vector<128x256xf32> -> vector<128x256xf32>
    %46 = vector.extract_strided_slice %45 {offsets = [0, 0], sizes = [32, 256], strides = [1, 1]} : vector<128x256xf32> to vector<32x256xf32>
    %47 = vector.extract_strided_slice %45 {offsets = [32, 0], sizes = [32, 256], strides = [1, 1]} : vector<128x256xf32> to vector<32x256xf32>
    %48 = vector.extract_strided_slice %45 {offsets = [64, 0], sizes = [32, 256], strides = [1, 1]} : vector<128x256xf32> to vector<32x256xf32>
    %49 = vector.extract_strided_slice %45 {offsets = [96, 0], sizes = [32, 256], strides = [1, 1]} : vector<128x256xf32> to vector<32x256xf32>
    %c1_24 = arith.constant 1 : index
    %c0_25 = arith.constant 0 : index
    %c0_26 = arith.constant 0 : index
    %50 = vector.load %arg3[%c1_24, %c0_25, %c0_26] : memref<2x32x256xf32, #tpu.memory_space<vmem>>, vector<1x32x256xf32>
    %51 = vector.shape_cast %50 : vector<1x32x256xf32> to vector<32x256xf32>
    %cst_27 = arith.constant 5.000000e-01 : f32
    %52 = vector.broadcast %cst_27 : f32 to vector<32x256xf32>
    %53 = arith.mulf %52, %47 : vector<32x256xf32>
    %54 = math.tanh %53 : vector<32x256xf32>
    %cst_28 = arith.constant 5.000000e-01 : f32
    %55 = vector.broadcast %cst_28 : f32 to vector<32x256xf32>
    %56 = arith.mulf %55, %54 : vector<32x256xf32>
    %cst_29 = arith.constant 5.000000e-01 : f32
    %57 = vector.broadcast %cst_29 : f32 to vector<32x256xf32>
    %58 = arith.addf %56, %57 : vector<32x256xf32>
    %59 = arith.mulf %58, %51 : vector<32x256xf32>
    %cst_30 = arith.constant 5.000000e-01 : f32
    %60 = vector.broadcast %cst_30 : f32 to vector<32x256xf32>
    %61 = arith.mulf %60, %46 : vector<32x256xf32>
    %62 = math.tanh %61 : vector<32x256xf32>
    %cst_31 = arith.constant 5.000000e-01 : f32
    %63 = vector.broadcast %cst_31 : f32 to vector<32x256xf32>
    %64 = arith.mulf %63, %62 : vector<32x256xf32>
    %cst_32 = arith.constant 5.000000e-01 : f32
    %65 = vector.broadcast %cst_32 : f32 to vector<32x256xf32>
    %66 = arith.addf %64, %65 : vector<32x256xf32>
    %67 = math.tanh %49 : vector<32x256xf32>
    %68 = arith.mulf %66, %67 : vector<32x256xf32>
    %69 = arith.addf %59, %68 : vector<32x256xf32>
    %cst_33 = arith.constant 5.000000e-01 : f32
    %70 = vector.broadcast %cst_33 : f32 to vector<32x256xf32>
    %71 = arith.mulf %70, %48 : vector<32x256xf32>
    %72 = math.tanh %71 : vector<32x256xf32>
    %cst_34 = arith.constant 5.000000e-01 : f32
    %73 = vector.broadcast %cst_34 : f32 to vector<32x256xf32>
    %74 = arith.mulf %73, %72 : vector<32x256xf32>
    %cst_35 = arith.constant 5.000000e-01 : f32
    %75 = vector.broadcast %cst_35 : f32 to vector<32x256xf32>
    %76 = arith.addf %74, %75 : vector<32x256xf32>
    %77 = math.tanh %69 : vector<32x256xf32>
    %78 = arith.mulf %76, %77 : vector<32x256xf32>
    %c1_36 = arith.constant 1 : index
    %c0_37 = arith.constant 0 : index
    %c0_38 = arith.constant 0 : index
    %79 = vector.load %arg5[%c1_36, %c0_37, %c0_38] : memref<2x64x256xf32, #tpu.memory_space<vmem>>, vector<1x32x256xf32>
    %80 = vector.shape_cast %79 : vector<1x32x256xf32> to vector<32x256xf32>
    %81 = vector.shape_cast %78 : vector<32x256xf32> to vector<1x32x256xf32>
    tpu.vector_store %arg5[%c1_36, %c0_37, %c0_38], %81 {strides = array<i32>} : memref<2x64x256xf32, #tpu.memory_space<vmem>>, vector<1x32x256xf32>,
    %c1_39 = arith.constant 1 : index
    %c32_40 = arith.constant 32 : index
    %c0_41 = arith.constant 0 : index
    %82 = vector.load %arg5[%c1_39, %c32_40, %c0_41] : memref<2x64x256xf32, #tpu.memory_space<vmem>>, vector<1x32x256xf32>
    %83 = vector.shape_cast %82 : vector<1x32x256xf32> to vector<32x256xf32>
    %84 = vector.shape_cast %69 : vector<32x256xf32> to vector<1x32x256xf32>
    tpu.vector_store %arg5[%c1_39, %c32_40, %c0_41], %84 {strides = array<i32>} : memref<2x64x256xf32, #tpu.memory_space<vmem>>, vector<1x32x256xf32>,
    return
  }
  func.func @transform_0(%arg0: i32, %arg1: i32) -> (i32, i32, i32) {
    %c0_i32 = arith.constant 0 : i32
    %c0_i32_0 = arith.constant 0 : i32
    return %arg0, %c0_i32, %arg1 : i32, i32, i32
  }
  func.func @transform_1(%arg0: i32, %arg1: i32) -> (i32, i32, i32) {
    %c0_i32 = arith.constant 0 : i32
    %c0_i32_0 = arith.constant 0 : i32
    return %arg0, %c0_i32, %arg1 : i32, i32, i32
  }
  func.func @transform_2(%arg0: i32, %arg1: i32) -> (i32, i32) {
    %c0_i32 = arith.constant 0 : i32
    %c0_i32_0 = arith.constant 0 : i32
    %c0_i32_1 = arith.constant 0 : i32
    return %c0_i32, %c0_i32_0 : i32, i32
  }
  func.func @transform_3(%arg0: i32, %arg1: i32) -> (i32, i32, i32) {
    %c0_i32 = arith.constant 0 : i32
    %c0_i32_0 = arith.constant 0 : i32
    return %arg0, %c0_i32, %arg1 : i32, i32, i32
  }
}

</mosaic_0001>

<llo_original>
// kernel: tpu_custom_call.1
$region0: #{tpu_custom_call.1}
  #allocation0 [shape = 'u32[]', space=smem, size = 0x4, offset = 0x4, fixed_abs, tag = 'smem constant byte address 0x4 - core index']
  #allocation1 [shape = 'u32[144,128]{1,0:T(1,128)}', space=vmem, size = 0x12000, scoped, tag = 'internal scratch']
  %s0 = inlined_call_operand.hbm [shape: f32[2,384,256], index: 0, kind: input, shape index: {}]
  %s1 = inlined_call_operand.hbm [shape: f32[2,32,256], index: 1, kind: input, shape index: {}]
  %s2 = inlined_call_operand.hbm [shape: f32[128,384], index: 2, kind: input, shape index: {}]
  %s3 = inlined_call_operand.hbm [shape: f32[2,64,256], index: 3, kind: output, shape index: {}]
  %s4 = sld [smem:[#allocation0]]
  $region34: #{tpu_custom_call.1} parent=0
    _
  %s6 = ssub.s32 1, %s4
  %s7 = scalar_select 0, %s6, %s4
  $region1: #{tpu_custom_call.1} parent=0
    #allocation2 [shape = 'u8[786432]{0}', space=vmem, size = 0xc0000, scoped, tag = 'input window, operand 0, single buffered']
    #allocation3 [shape = 's32[1]{0}', space=sflag, size = 0x4, scoped, tag = 'scoped memory for tpu_custom_call.1']
    #allocation4 [shape = 's32[1]{0}', space=sflag, size = 0x4, scoped, tag = 'scoped memory for tpu_custom_call.1']
    #allocation5 [shape = 'u8[65536]{0}', space=vmem, size = 0x10000, scoped, tag = 'input window, operand 1, single buffered']
    #allocation6 [shape = 's32[1]{0}', space=sflag, size = 0x4, scoped, tag = 'scoped memory for tpu_custom_call.1']
    #allocation7 [shape = 'u8[196608]{0}', space=vmem, size = 0x30000, scoped, tag = 'input window, operand 2, single buffered']
    #allocation8 [shape = 'u8[131072]{0}', space=vmem, size = 0x20000, scoped, tag = 'output window, operand 0, single buffered']
    %8 = vsyncpa [#allocation3], 0
    %9 = vsyncpa [#allocation6], 0
    %10 = vsyncpa [#allocation4], 0
    // Predicated region
    $region2: #{tpu_custom_call.1} parent=1 // pred_check
      _
    $region3: #{tpu_custom_call.1} parent=1 // pred_check_branch
      %12 = sbr.rel (0) target = $region5
    $region4: #{tpu_custom_call.1} parent=1 // pred_region
      %s14 = ssub.s32 24576, 24576
      %15 = vsyncadd [#allocation3], %s14
      %s16 = sshll.u32 [#allocation2], 4
      %s17 = int_to_ptr.vmem [resolvable:$true] %s16
      %22 = dma.hbm_to_vmem [thread:$0]  %s0, 24576, %s17, [#allocation3], 256, 256, 16
    $region5: #{tpu_custom_call.1} parent=1 // pred_fallthru
      _
    // Predicated region
    $region6: #{tpu_custom_call.1} parent=1 // pred_check
      _
    $region7: #{tpu_custom_call.1} parent=1 // pred_check_branch
      %24 = sbr.rel (0) target = $region9
    $region8: #{tpu_custom_call.1} parent=1 // pred_region
      %s26 = ssub.s32 2048, 2048
      %27 = vsyncadd [#allocation6], %s26
      %s28 = sshll.u32 [#allocation5], 4
      %s29 = int_to_ptr.vmem [resolvable:$true] %s28
      %34 = dma.hbm_to_vmem [thread:$0]  %s1, 2048, %s29, [#allocation6], 256, 256, 16
    $region9: #{tpu_custom_call.1} parent=1 // pred_fallthru
      _
    // Predicated region
    $region10: #{tpu_custom_call.1} parent=1 // pred_check
      _
    $region11: #{tpu_custom_call.1} parent=1 // pred_check_branch
      %36 = sbr.rel (0) target = $region13
    $region12: #{tpu_custom_call.1} parent=1 // pred_region
      %s38 = ssub.s32 6144, 6144
      %39 = vsyncadd [#allocation6], %s38
      %s40 = sshll.u32 [#allocation7], 4
      %s41 = int_to_ptr.vmem [resolvable:$true] %s40
      %46 = dma.hbm_to_vmem [thread:$0]  %s2, 6144, %s41, [#allocation6], 384, 384, 24
    $region13: #{tpu_custom_call.1} parent=1 // pred_fallthru
      _
    // Predicated region
    $region14: #{tpu_custom_call.1} parent=1 // pred_check
      _
    $region15: #{tpu_custom_call.1} parent=1 // pred_check_branch
      %48 = sbr.rel (0) target = $region17
    $region16: #{tpu_custom_call.1} parent=1 // pred_region
      %49 = dma.done [#allocation3], 24576
    $region17: #{tpu_custom_call.1} parent=1 // pred_fallthru
      _
    // Predicated region
    $region18: #{tpu_custom_call.1} parent=1 // pred_check
      _
    $region19: #{tpu_custom_call.1} parent=1 // pred_check_branch
      %51 = sbr.rel (0) target = $region21
    $region20: #{tpu_custom_call.1} parent=1 // pred_region
      %52 = dma.done [#allocation6], 2048
    $region21: #{tpu_custom_call.1} parent=1 // pred_fallthru
      _
    // Predicated region
    $region22: #{tpu_custom_call.1} parent=1 // pred_check
      _
    $region23: #{tpu_custom_call.1} parent=1 // pred_check_branch
      %54 = sbr.rel (0) target = $region25
    $region24: #{tpu_custom_call.1} parent=1 // pred_region
      %55 = dma.done [#allocation6], 6144
    $region25: #{tpu_custom_call.1} parent=1 // pred_fallthru
      _
    %v56 = vld [vmem:[#allocation7] sm:$0xff]
    %v57 = vld [vmem:[#allocation7 + $0x8] sm:$0xff]
    %v58 = vld [vmem:[#allocation7 + $0x10] sm:$0xff]
    %v59 = vld [vmem:[#allocation7 + $0x18] sm:$0xff]
    %v60 = vld [vmem:[#allocation7 + $0x20] sm:$0xff]
    %v61 = vld [vmem:[#allocation7 + $0x28] sm:$0xff]
    %v62 = vld [vmem:[#allocation7 + $0x30] sm:$0xff]
    %v63 = vld [vmem:[#allocation7 + $0x38] sm:$0xff]
    %v64 = vld [vmem:[#allocation7 + $0x40] sm:$0xff]
    %v65 = vld [vmem:[#allocation7 + $0x48] sm:$0xff]
    %v66 = vld [vmem:[#allocation7 + $0x50] sm:$0xff]
    %v67 = vld [vmem:[#allocation7 + $0x58] sm:$0xff]
    %v68 = vld [vmem:[#allocation7 + $0x60] sm:$0xff]
    %v69 = vld [vmem:[#allocation7 + $0x68] sm:$0xff]
    %v70 = vld [vmem:[#allocation7 + $0x70] sm:$0xff]
    %v71 = vld [vmem:[#allocation7 + $0x78] sm:$0xff]
    %v72 = vld [vmem:[#allocation7 + $0x80] sm:$0xff]
    %v73 = vld [vmem:[#allocation7 + $0x88] sm:$0xff]
    %v74 = vld [vmem:[#allocation7 + $0x90] sm:$0xff]
    %v75 = vld [vmem:[#allocation7 + $0x98] sm:$0xff]
    %v76 = vld [vmem:[#allocation7 + $0xa0] sm:$0xff]
    %v77 = vld [vmem:[#allocation7 + $0xa8] sm:$0xff]
    %v78 = vld [vmem:[#allocation7 + $0xb0] sm:$0xff]
    %v79 = vld [vmem:[#allocation7 + $0xb8] sm:$0xff]
    %v80 = vld [vmem:[#allocation7 + $0xc0] sm:$0xff]
    %v81 = vld [vmem:[#allocation7 + $0xc8] sm:$0xff]
    %v82 = vld [vmem:[#allocation7 + $0xd0] sm:$0xff]
    %v83 = vld [vmem:[#allocation7 + $0xd8] sm:$0xff]
    %v84 = vld [vmem:[#allocation7 + $0xe0] sm:$0xff]
    %v85 = vld [vmem:[#allocation7 + $0xe8] sm:$0xff]
    %v86 = vld [vmem:[#allocation7 + $0xf0] sm:$0xff]
    %v87 = vld [vmem:[#allocation7 + $0xf8] sm:$0xff]
    %v88 = vld [vmem:[#allocation7 + $0x100] sm:$0xff]
    %v89 = vld [vmem:[#allocation7 + $0x108] sm:$0xff]
    %v90 = vld [vmem:[#allocation7 + $0x110] sm:$0xff]
    %v91 = vld [vmem:[#allocation7 + $0x118] sm:$0xff]
    %v92 = vld [vmem:[#allocation7 + $0x120] sm:$0xff]
    %v93 = vld [vmem:[#allocation7 + $0x128] sm:$0xff]
    %v94 = vld [vmem:[#allocation7 + $0x130] sm:$0xff]
    %v95 = vld [vmem:[#allocation7 + $0x138] sm:$0xff]
    %v96 = vld [vmem:[#allocation7 + $0x140] sm:$0xff]
    %v97 = vld [vmem:[#allocation7 + $0x148] sm:$0xff]
    %v98 = vld [vmem:[#allocation7 + $0x150] sm:$0xff]
    %v99 = vld [vmem:[#allocation7 + $0x158] sm:$0xff]
    %v100 = vld [vmem:[#allocation7 + $0x160] sm:$0xff]
    %v101 = vld [vmem:[#allocation7 + $0x168] sm:$0xff]
    %v102 = vld [vmem:[#allocation7 + $0x170] sm:$0xff]
    %v103 = vld [vmem:[#allocation7 + $0x178] sm:$0xff]
    %v104 = vld [vmem:[#allocation2] sm:$0xff]
    %v105 = vld [vmem:[#allocation2 + $0x8] sm:$0xff]
    %v106 = vld [vmem:[#allocation2 + $0x10] sm:$0xff]
    %v107 = vld [vmem:[#allocation2 + $0x18] sm:$0xff]
    %v108 = vld [vmem:[#allocation2 + $0x20] sm:$0xff]
    %v109 = vld [vmem:[#allocation2 + $0x28] sm:$0xff]
    %v110 = vld [vmem:[#allocation2 + $0x30] sm:$0xff]
    %v111 = vld [vmem:[#allocation2 + $0x38] sm:$0xff]
    %v112 = vld [vmem:[#allocation2 + $0x40] sm:$0xff]
    %v113 = vld [vmem:[#allocation2 + $0x48] sm:$0xff]
    %v114 = vld [vmem:[#allocation2 + $0x50] sm:$0xff]
    %v115 = vld [vmem:[#allocation2 + $0x58] sm:$0xff]
    %v116 = vld [vmem:[#allocation2 + $0x60] sm:$0xff]
    %v117 = vld [vmem:[#allocation2 + $0x68] sm:$0xff]
    %v118 = vld [vmem:[#allocation2 + $0x70] sm:$0xff]
    %v119 = vld [vmem:[#allocation2 + $0x78] sm:$0xff]
    %v120 = vld [vmem:[#allocation2 + $0x80] sm:$0xff]
    %v121 = vld [vmem:[#allocation2 + $0x88] sm:$0xff]
    %v122 = vld [vmem:[#allocation2 + $0x90] sm:$0xff]
    %v123 = vld [vmem:[#allocation2 + $0x98] sm:$0xff]
    %v124 = vld [vmem:[#allocation2 + $0xa0] sm:$0xff]
    %v125 = vld [vmem:[#allocation2 + $0xa8] sm:$0xff]
    %v126 = vld [vmem:[#allocation2 + $0xb0] sm:$0xff]
    %v127 = vld [vmem:[#allocation2 + $0xb8] sm:$0xff]
    %v128 = vld [vmem:[#allocation2 + $0xc0] sm:$0xff]
    %v129 = vld [vmem:[#allocation2 + $0xc8] sm:$0xff]
    %v130 = vld [vmem:[#allocation2 + $0xd0] sm:$0xff]
    %v131 = vld [vmem:[#allocation2 + $0xd8] sm:$0xff]
    %v132 = vld [vmem:[#allocation2 + $0xe0] sm:$0xff]
    %v133 = vld [vmem:[#allocation2 + $0xe8] sm:$0xff]
    %v134 = vld [vmem:[#allocation2 + $0xf0] sm:$0xff]
    %v135 = vld [vmem:[#allocation2 + $0xf8] sm:$0xff]
    %v136 = vld [vmem:[#allocation2 + $0x100] sm:$0xff]
    %v137 = vld [vmem:[#allocation2 + $0x108] sm:$0xff]
    %v138 = vld [vmem:[#allocation2 + $0x110] sm:$0xff]
    %v139 = vld [vmem:[#allocation2 + $0x118] sm:$0xff]
    %v140 = vld [vmem:[#allocation2 + $0x120] sm:$0xff]
    %v141 = vld [vmem:[#allocation2 + $0x128] sm:$0xff]
    %v142 = vld [vmem:[#allocation2 + $0x130] sm:$0xff]
    %v143 = vld [vmem:[#allocation2 + $0x138] sm:$0xff]
    %v144 = vld [vmem:[#allocation2 + $0x140] sm:$0xff]
    %v145 = vld [vmem:[#allocation2 + $0x148] sm:$0xff]
    %v146 = vld [vmem:[#allocation2 + $0x150] sm:$0xff]
    %v147 = vld [vmem:[#allocation2 + $0x158] sm:$0xff]
    %v148 = vld [vmem:[#allocation2 + $0x160] sm:$0xff]
    %v149 = vld [vmem:[#allocation2 + $0x168] sm:$0xff]
    %v150 = vld [vmem:[#allocation2 + $0x170] sm:$0xff]
    %v151 = vld [vmem:[#allocation2 + $0x178] sm:$0xff]
    %v152 = vld [vmem:[#allocation2 + $0x180] sm:$0xff]
    %v153 = vld [vmem:[#allocation2 + $0x188] sm:$0xff]
    %v154 = vld [vmem:[#allocation2 + $0x190] sm:$0xff]
    %v155 = vld [vmem:[#allocation2 + $0x198] sm:$0xff]
    %v156 = vld [vmem:[#allocation2 + $0x1a0] sm:$0xff]
    %v157 = vld [vmem:[#allocation2 + $0x1a8] sm:$0xff]
    %v158 = vld [vmem:[#allocation2 + $0x1b0] sm:$0xff]
    %v159 = vld [vmem:[#allocation2 + $0x1b8] sm:$0xff]
    %v160 = vld [vmem:[#allocation2 + $0x1c0] sm:$0xff]
    %v161 = vld [vmem:[#allocation2 + $0x1c8] sm:$0xff]
    %v162 = vld [vmem:[#allocation2 + $0x1d0] sm:$0xff]
    %v163 = vld [vmem:[#allocation2 + $0x1d8] sm:$0xff]
    %v164 = vld [vmem:[#allocation2 + $0x1e0] sm:$0xff]
    %v165 = vld [vmem:[#allocation2 + $0x1e8] sm:$0xff]
    %v166 = vld [vmem:[#allocation2 + $0x1f0] sm:$0xff]
    %v167 = vld [vmem:[#allocation2 + $0x1f8] sm:$0xff]
    %v168 = vld [vmem:[#allocation2 + $0x200] sm:$0xff]
    %v169 = vld [vmem:[#allocation2 + $0x208] sm:$0xff]
    %v170 = vld [vmem:[#allocation2 + $0x210] sm:$0xff]
    %v171 = vld [vmem:[#allocation2 + $0x218] sm:$0xff]
    %v172 = vld [vmem:[#allocation2 + $0x220] sm:$0xff]
    %v173 = vld [vmem:[#allocation2 + $0x228] sm:$0xff]
    %v174 = vld [vmem:[#allocation2 + $0x230] sm:$0xff]
    %v175 = vld [vmem:[#allocation2 + $0x238] sm:$0xff]
    %v176 = vld [vmem:[#allocation2 + $0x240] sm:$0xff]
    %v177 = vld [vmem:[#allocation2 + $0x248] sm:$0xff]
    %v178 = vld [vmem:[#allocation2 + $0x250] sm:$0xff]
    %v179 = vld [vmem:[#allocation2 + $0x258] sm:$0xff]
    %v180 = vld [vmem:[#allocation2 + $0x260] sm:$0xff]
    %v181 = vld [vmem:[#allocation2 + $0x268] sm:$0xff]
    %v182 = vld [vmem:[#allocation2 + $0x270] sm:$0xff]
    %v183 = vld [vmem:[#allocation2 + $0x278] sm:$0xff]
    %v184 = vld [vmem:[#allocation2 + $0x280] sm:$0xff]
    %v185 = vld [vmem:[#allocation2 + $0x288] sm:$0xff]
    %v186 = vld [vmem:[#allocation2 + $0x290] sm:$0xff]
    %v187 = vld [vmem:[#allocation2 + $0x298] sm:$0xff]
    %v188 = vld [vmem:[#allocation2 + $0x2a0] sm:$0xff]
    %v189 = vld [vmem:[#allocation2 + $0x2a8] sm:$0xff]
    %v190 = vld [vmem:[#allocation2 + $0x2b0] sm:$0xff]
    %v191 = vld [vmem:[#allocation2 + $0x2b8] sm:$0xff]
    %v192 = vld [vmem:[#allocation2 + $0x2c0] sm:$0xff]
    %v193 = vld [vmem:[#allocation2 + $0x2c8] sm:$0xff]
    %v194 = vld [vmem:[#allocation2 + $0x2d0] sm:$0xff]
    %v195 = vld [vmem:[#allocation2 + $0x2d8] sm:$0xff]
    %v196 = vld [vmem:[#allocation2 + $0x2e0] sm:$0xff]
    %v197 = vld [vmem:[#allocation2 + $0x2e8] sm:$0xff]
    %v198 = vld [vmem:[#allocation2 + $0x2f0] sm:$0xff]
    %v199 = vld [vmem:[#allocation2 + $0x2f8] sm:$0xff]
    %200 = vmatprep.subr.mxu0 %v105
    %201 = vmatpush1.msra.mxu0 %v104
    %202 = vmatprep.subr.mxu0 %v107
    %203 = vmatpush1.msra.mxu0 %v106
    %204 = vmatprep.subr.mxu0 %v109
    %205 = vmatpush1.msra.mxu0 %v108
    %206 = vmatprep.subr.mxu0 %v111
    %207 = vmatpush1.msra.mxu0 %v110
    %208 = vmatprep.subr.mxu0 %v113
    %209 = vmatpush1.msra.mxu0 %v112
    %210 = vmatprep.subr.mxu0 %v115
    %211 = vmatpush1.msra.mxu0 %v114
    %212 = vmatprep.subr.mxu0 %v117
    %213 = vmatpush1.msra.mxu0 %v116
    %214 = vmatprep.subr.mxu0 %v119
    %215 = vmatpush1.msra.mxu0 %v118
    %216 = vmatprep.subr.mxu0 %v121
    %217 = vmatpush1.msra.mxu0 %v120
    %218 = vmatprep.subr.mxu0 %v123
    %219 = vmatpush1.msra.mxu0 %v122
    %220 = vmatprep.subr.mxu0 %v125
    %221 = vmatpush1.msra.mxu0 %v124
    %222 = vmatprep.subr.mxu0 %v127
    %223 = vmatpush1.msra.mxu0 %v126
    %224 = vmatprep.subr.mxu0 %v129
    %225 = vmatpush1.msra.mxu0 %v128
    %226 = vmatprep.subr.mxu0 %v131
    %227 = vmatpush1.msra.mxu0 %v130
    %228 = vmatprep.subr.mxu0 %v133
    %229 = vmatpush1.msra.mxu0 %v132
    %230 = vmatprep.subr.mxu0 %v135
    %231 = vmatpush1.msra.mxu0 %v134
    %232 = vmatprep.subr.mxu0 %v137
    %233 = vmatpush1.msra.mxu0 %v136
    %234 = vmatprep.subr.mxu0 %v139
    %235 = vmatpush1.msra.mxu0 %v138
    %236 = vmatprep.subr.mxu0 %v141
    %237 = vmatpush1.msra.mxu0 %v140
    %238 = vmatprep.subr.mxu0 %v143
    %239 = vmatpush1.msra.mxu0 %v142
    %240 = vmatprep.subr.mxu0 %v145
    %241 = vmatpush1.msra.mxu0 %v144
    %242 = vmatprep.subr.mxu0 %v147
    %243 = vmatpush1.msra.mxu0 %v146
    %244 = vmatprep.subr.mxu0 %v149
    %245 = vmatpush1.msra.mxu0 %v148
    %246 = vmatprep.subr.mxu0 %v151
    %247 = vmatpush1.msra.mxu0 %v150
    %248 = vmatprep.subr.mxu0 %v153
    %249 = vmatpush1.msra.mxu0 %v152
    %250 = vmatprep.subr.mxu0 %v155
    %251 = vmatpush1.msra.mxu0 %v154
    %252 = vmatprep.subr.mxu0 %v157
    %253 = vmatpush1.msra.mxu0 %v156
    %254 = vmatprep.subr.mxu0 %v159
    %255 = vmatpush1.msra.mxu0 %v158
    %256 = vmatprep.subr.mxu0 %v161
    %257 = vmatpush1.msra.mxu0 %v160
    %258 = vmatprep.subr.mxu0 %v163
    %259 = vmatpush1.msra.mxu0 %v162
    %260 = vmatprep.subr.mxu0 %v165
    %261 = vmatpush1.msra.mxu0 %v164
    %262 = vmatprep.subr.mxu0 %v167
    %263 = vmatpush1.msra.mxu0 %v166
    %264 = vmatprep.mubr.f32.mxu0 %v57
    %265 = vmatmul.mubr.f32.gmra.mrb[0].mxu0 %v56
    %v266 = vpop.f32.mrb[0].mxu0
    %v267 = vadd.f32 0.0, %v266
    %v268 = vpop.f32.mrb[0].mxu0
    %v269 = vadd.f32 0.0, %v268
    %270 = vmatprep.mubr.f32.mxu0 %v60
    %271 = vmatmul.mubr.f32.gmra.mrb[0].mxu0 %v59
    %v272 = vpop.f32.mrb[0].mxu0
    %v273 = vadd.f32 0.0, %v272
    %v274 = vpop.f32.mrb[0].mxu0
    %v275 = vadd.f32 0.0, %v274
    %276 = vmatprep.mubr.f32.mxu0 %v63
    %277 = vmatmul.mubr.f32.gmra.mrb[0].mxu0 %v62
    %v278 = vpop.f32.mrb[0].mxu0
    %v279 = vadd.f32 0.0, %v278
    %v280 = vpop.f32.mrb[0].mxu0
    %v281 = vadd.f32 0.0, %v280
    %282 = vmatprep.mubr.f32.mxu0 %v66
    %283 = vmatmul.mubr.f32.gmra.mrb[0].mxu0 %v65
    %v284 = vpop.f32.mrb[0].mxu0
    %v285 = vadd.f32 0.0, %v284
    %v286 = vpop.f32.mrb[0].mxu0
    %v287 = vadd.f32 0.0, %v286
    %288 = vmatprep.mubr.f32.mxu0 %v69
    %289 = vmatmul.mubr.f32.gmra.mrb[0].mxu0 %v68
    %v290 = vpop.f32.mrb[0].mxu0
    %v291 = vadd.f32 0.0, %v290
    %v292 = vpop.f32.mrb[0].mxu0
    %v293 = vadd.f32 0.0, %v292
    %294 = vmatprep.mubr.f32.mxu0 %v72
    %295 = vmatmul.mubr.f32.gmra.mrb[0].mxu0 %v71
    %v296 = vpop.f32.mrb[0].mxu0
    %v297 = vadd.f32 0.0, %v296
    %v298 = vpop.f32.mrb[0].mxu0
    %v299 = vadd.f32 0.0, %v298
    %300 = vmatprep.mubr.f32.mxu0 %v75
    %301 = vmatmul.mubr.f32.gmra.mrb[0].mxu0 %v74
    %v302 = vpop.f32.mrb[0].mxu0
    %v303 = vadd.f32 0.0, %v302
    %v304 = vpop.f32.mrb[0].mxu0
    %v305 = vadd.f32 0.0, %v304
    %306 = vmatprep.mubr.f32.mxu0 %v78
    %307 = vmatmul.mubr.f32.gmra.mrb[0].mxu0 %v77
    %v308 = vpop.f32.mrb[0].mxu0
    %v309 = vadd.f32 0.0, %v308
    %v310 = vpop.f32.mrb[0].mxu0
    %v311 = vadd.f32 0.0, %v310
    %312 = vmatprep.mubr.f32.mxu0 %v81
    %313 = vmatmul.mubr.f32.gmra.mrb[0].mxu0 %v80
    %v314 = vpop.f32.mrb[0].mxu0
    %v315 = vadd.f32 0.0, %v314
    %v316 = vpop.f32.mrb[0].mxu0
    %v317 = vadd.f32 0.0, %v316
    %318 = vmatprep.mubr.f32.mxu0 %v84
    %319 = vmatmul.mubr.f32.gmra.mrb[0].mxu0 %v83
    %v320 = vpop.f32.mrb[0].mxu0
    %v321 = vadd.f32 0.0, %v320
    %v322 = vpop.f32.mrb[0].mxu0
    %v323 = vadd.f32 0.0, %v322
    %324 = vmatprep.mubr.f32.mxu0 %v87
    %325 = vmatmul.mubr.f32.gmra.mrb[0].mxu0 %v86
    %v326 = vpop.f32.mrb[0].mxu0
    %v327 = vadd.f32 0.0, %v326
    %v328 = vpop.f32.mrb[0].mxu0
    %v329 = vadd.f32 0.0, %v328
    %330 = vmatprep.mubr.f32.mxu0 %v90
    %331 = vmatmul.mubr.f32.gmra.mrb[0].mxu0 %v89
    %v332 = vpop.f32.mrb[0].mxu0
    %v333 = vadd.f32 0.0, %v332
    %v334 = vpop.f32.mrb[0].mxu0
    %v335 = vadd.f32 0.0, %v334
    %336 = vmatprep.mubr.f32.mxu0 %v93
    %337 = vmatmul.mubr.f32.gmra.mrb[0].mxu0 %v92
    %v338 = vpop.f32.mrb[0].mxu0
    %v339 = vadd.f32 0.0, %v338
    %v340 = vpop.f32.mrb[0].mxu0
    %v341 = vadd.f32 0.0, %v340
    %342 = vmatprep.mubr.f32.mxu0 %v96
    %343 = vmatmul.mubr.f32.gmra.mrb[0].mxu0 %v95
    %v344 = vpop.f32.mrb[0].mxu0
    %v345 = vadd.f32 0.0, %v344
    %v346 = vpop.f32.mrb[0].mxu0
    %v347 = vadd.f32 0.0, %v346
    %348 = vmatprep.mubr.f32.mxu0 %v99
    %349 = vmatmul.mubr.f32.gmra.mrb[0].mxu0 %v98
    %v350 = vpop.f32.mrb[0].mxu0
    %v351 = vadd.f32 0.0, %v350
    %v352 = vpop.f32.mrb[0].mxu0
    %v353 = vadd.f32 0.0, %v352
    %354 = vmatprep.mubr.f32.mxu0 %v102
    %355 = vmatmul.mubr.f32.gmra.mrb[0].mxu0 %v101
    %v356 = vpop.f32.mrb[0].mxu0
    %v357 = vadd.f32 0.0, %v356
    %v358 = vpop.f32.mrb[0].mxu0
    %v359 = vadd.f32 0.0, %v358
    %360 = vdwg.mxu0
    %361 = vmatprep.subr.mxu0 %v169
    %362 = vmatpush1.msra.mxu0 %v168
    %363 = vmatprep.subr.mxu0 %v171
    %364 = vmatpush1.msra.mxu0 %v170
    %365 = vmatprep.subr.mxu0 %v173
    %366 = vmatpush1.msra.mxu0 %v172
    %367 = vmatprep.subr.mxu0 %v175
    %368 = vmatpush1.msra.mxu0 %v174
    %369 = vmatprep.subr.mxu0 %v177
    %370 = vmatpush1.msra.mxu0 %v176
    %371 = vmatprep.subr.mxu0 %v179
    %372 = vmatpush1.msra.mxu0 %v178
    %373 = vmatprep.subr.mxu0 %v181
    %374 = vmatpush1.msra.mxu0 %v180
    %375 = vmatprep.subr.mxu0 %v183
    %376 = vmatpush1.msra.mxu0 %v182
    %377 = vmatprep.subr.mxu0 %v185
    %378 = vmatpush1.msra.mxu0 %v184
    %379 = vmatprep.subr.mxu0 %v187
    %380 = vmatpush1.msra.mxu0 %v186
    %381 = vmatprep.subr.mxu0 %v189
    %382 = vmatpush1.msra.mxu0 %v188
    %383 = vmatprep.subr.mxu0 %v191
    %384 = vmatpush1.msra.mxu0 %v190
    %385 = vmatprep.subr.mxu0 %v193
    %386 = vmatpush1.msra.mxu0 %v192
    %387 = vmatprep.subr.mxu0 %v195
    %388 = vmatpush1.msra.mxu0 %v194
    %389 = vmatprep.subr.mxu0 %v197
    %390 = vmatpush1.msra.mxu0 %v196
    %391 = vmatprep.subr.mxu0 %v199
    %392 = vmatpush1.msra.mxu0 %v198
    %393 = vmatprep.subr.mxu0 0.0
    %394 = vmatpush1.msra.mxu0 0.0
    %395 = vmatprep.subr.mxu0 0.0
    %396 = vmatpush1.msra.mxu0 0.0
    %397 = vmatprep.subr.mxu0 0.0
    %398 = vmatpush1.msra.mxu0 0.0
    %399 = vmatprep.subr.mxu0 0.0
    %400 = vmatpush1.msra.mxu0 0.0
    %401 = vmatprep.subr.mxu0 0.0
    %402 = vmatpush1.msra.mxu0 0.0
    %403 = vmatprep.subr.mxu0 0.0
    %404 = vmatpush1.msra.mxu0 0.0
    %405 = vmatprep.subr.mxu0 0.0
    %406 = vmatpush1.msra.mxu0 0.0
    %407 = vmatprep.subr.mxu0 0.0
    %408 = vmatpush1.msra.mxu0 0.0
    %409 = vmatprep.subr.mxu0 0.0
    %410 = vmatpush1.msra.mxu0 0.0
    %411 = vmatprep.subr.mxu0 0.0
    %412 = vmatpush1.msra.mxu0 0.0
    %413 = vmatprep.subr.mxu0 0.0
    %414 = vmatpush1.msra.mxu0 0.0
    %415 = vmatprep.subr.mxu0 0.0
    %416 = vmatpush1.msra.mxu0 0.0
    %417 = vmatprep.subr.mxu0 0.0
    %418 = vmatpush1.msra.mxu0 0.0
    %419 = vmatprep.subr.mxu0 0.0
    %420 = vmatpush1.msra.mxu0 0.0
    %421 = vmatprep.subr.mxu0 0.0
    %422 = vmatpush1.msra.mxu0 0.0
    %423 = vmatprep.subr.mxu0 0.0
    %424 = vmatpush1.msra.mxu0 0.0
    %425 = vmatprep.mubr.f32.mxu0 0.0
    %426 = vmatmul.mubr.f32.gmra.mrb[0].mxu0 %v58
    %v427 = vpop.f32.mrb[0].mxu0
    %v428 = vadd.f32 %v267, %v427
    %v429 = vpop.f32.mrb[0].mxu0
    %v430 = vadd.f32 %v269, %v429
    %431 = vmatprep.mubr.f32.mxu0 0.0
    %432 = vmatmul.mubr.f32.gmra.mrb[0].mxu0 %v61
    %v433 = vpop.f32.mrb[0].mxu0
    %v434 = vadd.f32 %v273, %v433
    %v435 = vpop.f32.mrb[0].mxu0
    %v436 = vadd.f32 %v275, %v435
    %437 = vmatprep.mubr.f32.mxu0 0.0
    %438 = vmatmul.mubr.f32.gmra.mrb[0].mxu0 %v64
    %v439 = vpop.f32.mrb[0].mxu0
    %v440 = vadd.f32 %v279, %v439
    %v441 = vpop.f32.mrb[0].mxu0
    %v442 = vadd.f32 %v281, %v441
    %443 = vmatprep.mubr.f32.mxu0 0.0
    %444 = vmatmul.mubr.f32.gmra.mrb[0].mxu0 %v67
    %v445 = vpop.f32.mrb[0].mxu0
    %v446 = vadd.f32 %v285, %v445
    %v447 = vpop.f32.mrb[0].mxu0
    %v448 = vadd.f32 %v287, %v447
    %449 = vmatprep.mubr.f32.mxu0 0.0
    %450 = vmatmul.mubr.f32.gmra.mrb[0].mxu0 %v70
    %v451 = vpop.f32.mrb[0].mxu0
    %v452 = vadd.f32 %v291, %v451
    %v453 = vpop.f32.mrb[0].mxu0
    %v454 = vadd.f32 %v293, %v453
    %455 = vmatprep.mubr.f32.mxu0 0.0
    %456 = vmatmul.mubr.f32.gmra.mrb[0].mxu0 %v73
    %v457 = vpop.f32.mrb[0].mxu0
    %v458 = vadd.f32 %v297, %v457
    %v459 = vpop.f32.mrb[0].mxu0
    %v460 = vadd.f32 %v299, %v459
    %461 = vmatprep.mubr.f32.mxu0 0.0
    %462 = vmatmul.mubr.f32.gmra.mrb[0].mxu0 %v76
    %v463 = vpop.f32.mrb[0].mxu0
    %v464 = vadd.f32 %v303, %v463
    %v465 = vpop.f32.mrb[0].mxu0
    %v466 = vadd.f32 %v305, %v465
    %467 = vmatprep.mubr.f32.mxu0 0.0
    %468 = vmatmul.mubr.f32.gmra.mrb[0].mxu0 %v79
    %v469 = vpop.f32.mrb[0].mxu0
    %v470 = vadd.f32 %v309, %v469
    %v471 = vpop.f32.mrb[0].mxu0
    %v472 = vadd.f32 %v311, %v471
    %473 = vmatprep.mubr.f32.mxu0 0.0
    %474 = vmatmul.mubr.f32.gmra.mrb[0].mxu0 %v82
    %v475 = vpop.f32.mrb[0].mxu0
    %v476 = vadd.f32 %v315, %v475
    %v477 = vpop.f32.mrb[0].mxu0
    %v478 = vadd.f32 %v317, %v477
    %479 = vmatprep.mubr.f32.mxu0 0.0
    %480 = vmatmul.mubr.f32.gmra.mrb[0].mxu0 %v85
    %v481 = vpop.f32.mrb[0].mxu0
    %v482 = vadd.f32 %v321, %v481
    %v483 = vpop.f32.mrb[0].mxu0
    %v484 = vadd.f32 %v323, %v483
    %485 = vmatprep.mubr.f32.mxu0 0.0
    %486 = vmatmul.mubr.f32.gmra.mrb[0].mxu0 %v88
    %v487 = vpop.f32.mrb[0].mxu0
    %v488 = vadd.f32 %v327, %v487
    %v489 = vpop.f32.mrb[0].mxu0
    %v490 = vadd.f32 %v329, %v489
    %491 = vmatprep.mubr.f32.mxu0 0.0
    %492 = vmatmul.mubr.f32.gmra.mrb[0].mxu0 %v91
    %v493 = vpop.f32.mrb[0].mxu0
    %v494 = vadd.f32 %v333, %v493
    %v495 = vpop.f32.mrb[0].mxu0
    %v496 = vadd.f32 %v335, %v495
    %497 = vmatprep.mubr.f32.mxu0 0.0
    %498 = vmatmul.mubr.f32.gmra.mrb[0].mxu0 %v94
    %v499 = vpop.f32.mrb[0].mxu0
    %v500 = vadd.f32 %v339, %v499
    %v501 = vpop.f32.mrb[0].mxu0
    %v502 = vadd.f32 %v341, %v501
    %503 = vmatprep.mubr.f32.mxu0 0.0
    %504 = vmatmul.mubr.f32.gmra.mrb[0].mxu0 %v97
    %v505 = vpop.f32.mrb[0].mxu0
    %v506 = vadd.f32 %v345, %v505
    %v507 = vpop.f32.mrb[0].mxu0
    %v508 = vadd.f32 %v347, %v507
    %509 = vmatprep.mubr.f32.mxu0 0.0
    %510 = vmatmul.mubr.f32.gmra.mrb[0].mxu0 %v100
    %v511 = vpop.f32.mrb[0].mxu0
    %v512 = vadd.f32 %v351, %v511
    %v513 = vpop.f32.mrb[0].mxu0
    %v514 = vadd.f32 %v353, %v513
    %515 = vmatprep.mubr.f32.mxu0 0.0
    %516 = vmatmul.mubr.f32.gmra.mrb[0].mxu0 %v103
    %v517 = vpop.f32.mrb[0].mxu0
    %v518 = vadd.f32 %v357, %v517
    %v519 = vpop.f32.mrb[0].mxu0
    %v520 = vadd.f32 %v359, %v519
    %521 = vdwg.mxu0
    %v522 = vld [vmem:[#allocation5] sm:$0xff]
    %v523 = vld [vmem:[#allocation5 + $0x8] sm:$0xff]
    %v524 = vld [vmem:[#allocation5 + $0x10] sm:$0xff]
    %v525 = vld [vmem:[#allocation5 + $0x18] sm:$0xff]
    %v526 = vld [vmem:[#allocation5 + $0x20] sm:$0xff]
    %v527 = vld [vmem:[#allocation5 + $0x28] sm:$0xff]
    %v528 = vld [vmem:[#allocation5 + $0x30] sm:$0xff]
    %v529 = vld [vmem:[#allocation5 + $0x38] sm:$0xff]
    %v530 = vmul.f32 %v452, 0.5
    %v531 = vmul.f32 %v454, 0.5
    %v532 = vmul.f32 %v458, 0.5
    %v533 = vmul.f32 %v460, 0.5
    %v534 = vmul.f32 %v464, 0.5
    %v535 = vmul.f32 %v466, 0.5
    %v536 = vmul.f32 %v470, 0.5
    %v537 = vmul.f32 %v472, 0.5
    %v538 = vtanh.pop %v530
    %v539 = vtanh.pop %v531
    %v540 = vtanh.pop %v532
    %v541 = vtanh.pop %v533
    %v542 = vtanh.pop %v534
    %v543 = vtanh.pop %v535
    %v544 = vtanh.pop %v536
    %v545 = vtanh.pop %v537
    %v546 = vmul.f32 %v538, 0.5
    %v547 = vmul.f32 %v539, 0.5
    %v548 = vmul.f32 %v540, 0.5
    %v549 = vmul.f32 %v541, 0.5
    %v550 = vmul.f32 %v542, 0.5
    %v551 = vmul.f32 %v543, 0.5
    %v552 = vmul.f32 %v544, 0.5
    %v553 = vmul.f32 %v545, 0.5
    %v554 = vadd.f32 %v546, 0.5
    %v555 = vadd.f32 %v547, 0.5
    %v556 = vadd.f32 %v548, 0.5
    %v557 = vadd.f32 %v549, 0.5
    %v558 = vadd.f32 %v550, 0.5
    %v559 = vadd.f32 %v551, 0.5
    %v560 = vadd.f32 %v552, 0.5
    %v561 = vadd.f32 %v553, 0.5
    %v562 = vmul.f32 %v554, %v522
    %v563 = vmul.f32 %v555, %v523
    %v564 = vmul.f32 %v556, %v524
    %v565 = vmul.f32 %v557, %v525
    %v566 = vmul.f32 %v558, %v526
    %v567 = vmul.f32 %v559, %v527
    %v568 = vmul.f32 %v560, %v528
    %v569 = vmul.f32 %v561, %v529
    %v570 = vmul.f32 %v428, 0.5
    %v571 = vmul.f32 %v430, 0.5
    %v572 = vmul.f32 %v434, 0.5
    %v573 = vmul.f32 %v436, 0.5
    %v574 = vmul.f32 %v440, 0.5
    %v575 = vmul.f32 %v442, 0.5
    %v576 = vmul.f32 %v446, 0.5
    %v577 = vmul.f32 %v448, 0.5
    %v578 = vtanh.pop %v570
    %v579 = vtanh.pop %v571
    %v580 = vtanh.pop %v572
    %v581 = vtanh.pop %v573
    %v582 = vtanh.pop %v574
    %v583 = vtanh.pop %v575
    %v584 = vtanh.pop %v576
    %v585 = vtanh.pop %v577
    %v586 = vmul.f32 %v578, 0.5
    %v587 = vmul.f32 %v579, 0.5
    %v588 = vmul.f32 %v580, 0.5
    %v589 = vmul.f32 %v581, 0.5
    %v590 = vmul.f32 %v582, 0.5
    %v591 = vmul.f32 %v583, 0.5
    %v592 = vmul.f32 %v584, 0.5
    %v593 = vmul.f32 %v585, 0.5
    %v594 = vadd.f32 %v586, 0.5
    %v595 = vadd.f32 %v587, 0.5
    %v596 = vadd.f32 %v588, 0.5
    %v597 = vadd.f32 %v589, 0.5
    %v598 = vadd.f32 %v590, 0.5
    %v599 = vadd.f32 %v591, 0.5
    %v600 = vadd.f32 %v592, 0.5
    %v601 = vadd.f32 %v593, 0.5
    %v602 = vtanh.pop %v500
    %v603 = vtanh.pop %v502
    %v604 = vtanh.pop %v506
    %v605 = vtanh.pop %v508
    %v606 = vtanh.pop %v512
    %v607 = vtanh.pop %v514
    %v608 = vtanh.pop %v518
    %v609 = vtanh.pop %v520
    %v610 = vmul.f32 %v594, %v602
    %v611 = vmul.f32 %v595, %v603
    %v612 = vmul.f32 %v596, %v604
    %v613 = vmul.f32 %v597, %v605
    %v614 = vmul.f32 %v598, %v606
    %v615 = vmul.f32 %v599, %v607
    %v616 = vmul.f32 %v600, %v608
    %v617 = vmul.f32 %v601, %v609
    %v618 = vadd.f32 %v562, %v610
    %v619 = vadd.f32 %v563, %v611
    %v620 = vadd.f32 %v564, %v612
    %v621 = vadd.f32 %v565, %v613
    %v622 = vadd.f32 %v566, %v614
    %v623 = vadd.f32 %v567, %v615
    %v624 = vadd.f32 %v568, %v616
    %v625 = vadd.f32 %v569, %v617
    %v626 = vmul.f32 %v476, 0.5
    %v627 = vmul.f32 %v478, 0.5
    %v628 = vmul.f32 %v482, 0.5
    %v629 = vmul.f32 %v484, 0.5
    %v630 = vmul.f32 %v488, 0.5
    %v631 = vmul.f32 %v490, 0.5
    %v632 = vmul.f32 %v494, 0.5
    %v633 = vmul.f32 %v496, 0.5
    %v634 = vtanh.pop %v626
    %v635 = vtanh.pop %v627
    %v636 = vtanh.pop %v628
    %v637 = vtanh.pop %v629
    %v638 = vtanh.pop %v630
    %v639 = vtanh.pop %v631
    %v640 = vtanh.pop %v632
    %v641 = vtanh.pop %v633
    %v642 = vmul.f32 %v634, 0.5
    %v643 = vmul.f32 %v635, 0.5
    %v644 = vmul.f32 %v636, 0.5
    %v645 = vmul.f32 %v637, 0.5
    %v646 = vmul.f32 %v638, 0.5
    %v647 = vmul.f32 %v639, 0.5
    %v648 = vmul.f32 %v640, 0.5
    %v649 = vmul.f32 %v641, 0.5
    %v650 = vadd.f32 %v642, 0.5
    %v651 = vadd.f32 %v643, 0.5
    %v652 = vadd.f32 %v644, 0.5
    %v653 = vadd.f32 %v645, 0.5
    %v654 = vadd.f32 %v646, 0.5
    %v655 = vadd.f32 %v647, 0.5
    %v656 = vadd.f32 %v648, 0.5
    %v657 = vadd.f32 %v649, 0.5
    %v658 = vtanh.pop %v618
    %v659 = vtanh.pop %v619
    %v660 = vtanh.pop %v620
    %v661 = vtanh.pop %v621
    %v662 = vtanh.pop %v622
    %v663 = vtanh.pop %v623
    %v664 = vtanh.pop %v624
    %v665 = vtanh.pop %v625
    %v666 = vmul.f32 %v650, %v658
    %v667 = vmul.f32 %v651, %v659
    %v668 = vmul.f32 %v652, %v660
    %v669 = vmul.f32 %v653, %v661
    %v670 = vmul.f32 %v654, %v662
    %v671 = vmul.f32 %v655, %v663
    %v672 = vmul.f32 %v656, %v664
    %v673 = vmul.f32 %v657, %v665
    %674 = vst [vmem:[#allocation8] sm:$0xff] %v666
    %675 = vst [vmem:[#allocation8 + $0x8] sm:$0xff] %v667
    %676 = vst [vmem:[#allocation8 + $0x10] sm:$0xff] %v668
    %677 = vst [vmem:[#allocation8 + $0x18] sm:$0xff] %v669
    %678 = vst [vmem:[#allocation8 + $0x20] sm:$0xff] %v670
    %679 = vst [vmem:[#allocation8 + $0x28] sm:$0xff] %v671
    %680 = vst [vmem:[#allocation8 + $0x30] sm:$0xff] %v672
    %681 = vst [vmem:[#allocation8 + $0x38] sm:$0xff] %v673
    %682 = vst [vmem:[#allocation8 + $0x40] sm:$0xff] %v618
    %683 = vst [vmem:[#allocation8 + $0x48] sm:$0xff] %v619
    %684 = vst [vmem:[#allocation8 + $0x50] sm:$0xff] %v620
    %685 = vst [vmem:[#allocation8 + $0x58] sm:$0xff] %v621
    %686 = vst [vmem:[#allocation8 + $0x60] sm:$0xff] %v622
    %687 = vst [vmem:[#allocation8 + $0x68] sm:$0xff] %v623
    %688 = vst [vmem:[#allocation8 + $0x70] sm:$0xff] %v624
    %689 = vst [vmem:[#allocation8 + $0x78] sm:$0xff] %v625
    %s690 = scalar_lea.vmem [#allocation2], 768
    %v691 = vld [vmem:[%s690] sm:$0xff]
    %v692 = vld [vmem:[%s690 + $0x8] sm:$0xff]
    %v693 = vld [vmem:[%s690 + $0x10] sm:$0xff]
    %v694 = vld [vmem:[%s690 + $0x18] sm:$0xff]
    %v695 = vld [vmem:[%s690 + $0x20] sm:$0xff]
    %v696 = vld [vmem:[%s690 + $0x28] sm:$0xff]
    %v697 = vld [vmem:[%s690 + $0x30] sm:$0xff]
    %v698 = vld [vmem:[%s690 + $0x38] sm:$0xff]
    %v699 = vld [vmem:[%s690 + $0x40] sm:$0xff]
    %v700 = vld [vmem:[%s690 + $0x48] sm:$0xff]
    %v701 = vld [vmem:[%s690 + $0x50] sm:$0xff]
    %v702 = vld [vmem:[%s690 + $0x58] sm:$0xff]
    %v703 = vld [vmem:[%s690 + $0x60] sm:$0xff]
    %v704 = vld [vmem:[%s690 + $0x68] sm:$0xff]
    %v705 = vld [vmem:[%s690 + $0x70] sm:$0xff]
    %v706 = vld [vmem:[%s690 + $0x78] sm:$0xff]
    %v707 = vld [vmem:[%s690 + $0x80] sm:$0xff]
    %v708 = vld [vmem:[%s690 + $0x88] sm:$0xff]
    %v709 = vld [vmem:[%s690 + $0x90] sm:$0xff]
    %v710 = vld [vmem:[%s690 + $0x98] sm:$0xff]
    %v711 = vld [vmem:[%s690 + $0xa0] sm:$0xff]
    %v712 = vld [vmem:[%s690 + $0xa8] sm:$0xff]
    %v713 = vld [vmem:[%s690 + $0xb0] sm:$0xff]
    %v714 = vld [vmem:[%s690 + $0xb8] sm:$0xff]
    %v715 = vld [vmem:[%s690 + $0xc0] sm:$0xff]
    %v716 = vld [vmem:[%s690 + $0xc8] sm:$0xff]
    %v717 = vld [vmem:[%s690 + $0xd0] sm:$0xff]
    %v718 = vld [vmem:[%s690 + $0xd8] sm:$0xff]
    %v719 = vld [vmem:[%s690 + $0xe0] sm:$0xff]
    %v720 = vld [vmem:[%s690 + $0xe8] sm:$0xff]
    %v721 = vld [vmem:[%s690 + $0xf0] sm:$0xff]
    %v722 = vld [vmem:[%s690 + $0xf8] sm:$0xff]
    %v723 = vld [vmem:[%s690 + $0x100] sm:$0xff]
    %v724 = vld [vmem:[%s690 + $0x108] sm:$0xff]
    %v725 = vld [vmem:[%s690 + $0x110] sm:$0xff]
    %v726 = vld [vmem:[%s690 + $0x118] sm:$0xff]
    %v727 = vld [vmem:[%s690 + $0x120] sm:$0xff]
    %v728 = vld [vmem:[%s690 + $0x128] sm:$0xff]
    %v729 = vld [vmem:[%s690 + $0x130] sm:$0xff]
    %v730 = vld [vmem:[%s690 + $0x138] sm:$0xff]
    %v731 = vld [vmem:[%s690 + $0x140] sm:$0xff]
    %v732 = vld [vmem:[%s690 + $0x148] sm:$0xff]
    %v733 = vld [vmem:[%s690 + $0x150] sm:$0xff]
    %v734 = vld [vmem:[%s690 + $0x158] sm:$0xff]
    %v735 = vld [vmem:[%s690 + $0x160] sm:$0xff]
    %v736 = vld [vmem:[%s690 + $0x168] sm:$0xff]
    %v737 = vld [vmem:[%s690 + $0x170] sm:$0xff]
    %v738 = vld [vmem:[%s690 + $0x178] sm:$0xff]
    %v739 = vld [vmem:[%s690 + $0x180] sm:$0xff]
    %v740 = vld [vmem:[%s690 + $0x188] sm:$0xff]
    %v741 = vld [vmem:[%s690 + $0x190] sm:$0xff]
    %v742 = vld [vmem:[%s690 + $0x198] sm:$0xff]
    %v743 = vld [vmem:[%s690 + $0x1a0] sm:$0xff]
    %v744 = vld [vmem:[%s690 + $0x1a8] sm:$0xff]
    %v745 = vld [vmem:[%s690 + $0x1b0] sm:$0xff]
    %v746 = vld [vmem:[%s690 + $0x1b8] sm:$0xff]
    %v747 = vld [vmem:[%s690 + $0x1c0] sm:$0xff]
    %v748 = vld [vmem:[%s690 + $0x1c8] sm:$0xff]
    %v749 = vld [vmem:[%s690 + $0x1d0] sm:$0xff]
    %v750 = vld [vmem:[%s690 + $0x1d8] sm:$0xff]
    %v751 = vld [vmem:[%s690 + $0x1e0] sm:$0xff]
    %v752 = vld [vmem:[%s690 + $0x1e8] sm:$0xff]
    %v753 = vld [vmem:[%s690 + $0x1f0] sm:$0xff]
    %v754 = vld [vmem:[%s690 + $0x1f8] sm:$0xff]
    %v755 = vld [vmem:[%s690 + $0x200] sm:$0xff]
    %v756 = vld [vmem:[%s690 + $0x208] sm:$0xff]
    %v757 = vld [vmem:[%s690 + $0x210] sm:$0xff]
    %v758 = vld [vmem:[%s690 + $0x218] sm:$0xff]
    %v759 = vld [vmem:[%s690 + $0x220] sm:$0xff]
    %v760 = vld [vmem:[%s690 + $0x228] sm:$0xff]
    %v761 = vld [vmem:[%s690 + $0x230] sm:$0xff]
    %v762 = vld [vmem:[%s690 + $0x238] sm:$0xff]
    %v763 = vld [vmem:[%s690 + $0x240] sm:$0xff]
    %v764 = vld [vmem:[%s690 + $0x248] sm:$0xff]
    %v765 = vld [vmem:[%s690 + $0x250] sm:$0xff]
    %v766 = vld [vmem:[%s690 + $0x258] sm:$0xff]
    %v767 = vld [vmem:[%s690 + $0x260] sm:$0xff]
    %v768 = vld [vmem:[%s690 + $0x268] sm:$0xff]
    %v769 = vld [vmem:[%s690 + $0x270] sm:$0xff]
    %v770 = vld [vmem:[%s690 + $0x278] sm:$0xff]
    %v771 = vld [vmem:[%s690 + $0x280] sm:$0xff]
    %v772 = vld [vmem:[%s690 + $0x288] sm:$0xff]
    %v773 = vld [vmem:[%s690 + $0x290] sm:$0xff]
    %v774 = vld [vmem:[%s690 + $0x298] sm:$0xff]
    %v775 = vld [vmem:[%s690 + $0x2a0] sm:$0xff]
    %v776 = vld [vmem:[%s690 + $0x2a8] sm:$0xff]
    %v777 = vld [vmem:[%s690 + $0x2b0] sm:$0xff]
    %v778 = vld [vmem:[%s690 + $0x2b8] sm:$0xff]
    %v779 = vld [vmem:[%s690 + $0x2c0] sm:$0xff]
    %v780 = vld [vmem:[%s690 + $0x2c8] sm:$0xff]
    %v781 = vld [vmem:[%s690 + $0x2d0] sm:$0xff]
    %v782 = vld [vmem:[%s690 + $0x2d8] sm:$0xff]
    %v783 = vld [vmem:[%s690 + $0x2e0] sm:$0xff]
    %v784 = vld [vmem:[%s690 + $0x2e8] sm:$0xff]
    %v785 = vld [vmem:[%s690 + $0x2f0] sm:$0xff]
    %v786 = vld [vmem:[%s690 + $0x2f8] sm:$0xff]
    %787 = vmatprep.subr.mxu0 %v692
    %788 = vmatpush1.msra.mxu0 %v691
    %789 = vmatprep.subr.mxu0 %v694
    %790 = vmatpush1.msra.mxu0 %v693
    %791 = vmatprep.subr.mxu0 %v696
    %792 = vmatpush1.msra.mxu0 %v695
    %793 = vmatprep.subr.mxu0 %v698
    %794 = vmatpush1.msra.mxu0 %v697
    %795 = vmatprep.subr.mxu0 %v700
    %796 = vmatpush1.msra.mxu0 %v699
    %797 = vmatprep.subr.mxu0 %v702
    %798 = vmatpush1.msra.mxu0 %v701
    %799 = vmatprep.subr.mxu0 %v704
    %800 = vmatpush1.msra.mxu0 %v703
    %801 = vmatprep.subr.mxu0 %v706
    %802 = vmatpush1.msra.mxu0 %v705
    %803 = vmatprep.subr.mxu0 %v708
    %804 = vmatpush1.msra.mxu0 %v707
    %805 = vmatprep.subr.mxu0 %v710
    %806 = vmatpush1.msra.mxu0 %v709
    %807 = vmatprep.subr.mxu0 %v712
    %808 = vmatpush1.msra.mxu0 %v711
    %809 = vmatprep.subr.mxu0 %v714
    %810 = vmatpush1.msra.mxu0 %v713
    %811 = vmatprep.subr.mxu0 %v716
    %812 = vmatpush1.msra.mxu0 %v715
    %813 = vmatprep.subr.mxu0 %v718
    %814 = vmatpush1.msra.mxu0 %v717
    %815 = vmatprep.subr.mxu0 %v720
    %816 = vmatpush1.msra.mxu0 %v719
    %817 = vmatprep.subr.mxu0 %v722
    %818 = vmatpush1.msra.mxu0 %v721
    %819 = vmatprep.subr.mxu0 %v724
    %820 = vmatpush1.msra.mxu0 %v723
    %821 = vmatprep.subr.mxu0 %v726
    %822 = vmatpush1.msra.mxu0 %v725
    %823 = vmatprep.subr.mxu0 %v728
    %824 = vmatpush1.msra.mxu0 %v727
    %825 = vmatprep.subr.mxu0 %v730
    %826 = vmatpush1.msra.mxu0 %v729
    %827 = vmatprep.subr.mxu0 %v732
    %828 = vmatpush1.msra.mxu0 %v731
    %829 = vmatprep.subr.mxu0 %v734
    %830 = vmatpush1.msra.mxu0 %v733
    %831 = vmatprep.subr.mxu0 %v736
    %832 = vmatpush1.msra.mxu0 %v735
    %833 = vmatprep.subr.mxu0 %v738
    %834 = vmatpush1.msra.mxu0 %v737
    %835 = vmatprep.subr.mxu0 %v740
    %836 = vmatpush1.msra.mxu0 %v739
    %837 = vmatprep.subr.mxu0 %v742
    %838 = vmatpush1.msra.mxu0 %v741
    %839 = vmatprep.subr.mxu0 %v744
    %840 = vmatpush1.msra.mxu0 %v743
    %841 = vmatprep.subr.mxu0 %v746
    %842 = vmatpush1.msra.mxu0 %v745
    %843 = vmatprep.subr.mxu0 %v748
    %844 = vmatpush1.msra.mxu0 %v747
    %845 = vmatprep.subr.mxu0 %v750
    %846 = vmatpush1.msra.mxu0 %v749
    %847 = vmatprep.subr.mxu0 %v752
    %848 = vmatpush1.msra.mxu0 %v751
    %849 = vmatprep.subr.mxu0 %v754
    %850 = vmatpush1.msra.mxu0 %v753
    %851 = vmatprep.mubr.f32.mxu0 %v57
    %852 = vmatmul.mubr.f32.gmra.mrb[0].mxu0 %v56
    %v853 = vpop.f32.mrb[0].mxu0
    %v854 = vadd.f32 0.0, %v853
    %v855 = vpop.f32.mrb[0].mxu0
    %v856 = vadd.f32 0.0, %v855
    %857 = vmatprep.mubr.f32.mxu0 %v60
    %858 = vmatmul.mubr.f32.gmra.mrb[0].mxu0 %v59
    %v859 = vpop.f32.mrb[0].mxu0
    %v860 = vadd.f32 0.0, %v859
    %v861 = vpop.f32.mrb[0].mxu0
    %v862 = vadd.f32 0.0, %v861
    %863 = vmatprep.mubr.f32.mxu0 %v63
    %864 = vmatmul.mubr.f32.gmra.mrb[0].mxu0 %v62
    %v865 = vpop.f32.mrb[0].mxu0
    %v866 = vadd.f32 0.0, %v865
    %v867 = vpop.f32.mrb[0].mxu0
    %v868 = vadd.f32 0.0, %v867
    %869 = vmatprep.mubr.f32.mxu0 %v66
    %870 = vmatmul.mubr.f32.gmra.mrb[0].mxu0 %v65
    %v871 = vpop.f32.mrb[0].mxu0
    %v872 = vadd.f32 0.0, %v871
    %v873 = vpop.f32.mrb[0].mxu0
    %v874 = vadd.f32 0.0, %v873
    %875 = vmatprep.mubr.f32.mxu0 %v69
    %876 = vmatmul.mubr.f32.gmra.mrb[0].mxu0 %v68
    %v877 = vpop.f32.mrb[0].mxu0
    %v878 = vadd.f32 0.0, %v877
    %v879 = vpop.f32.mrb[0].mxu0
    %v880 = vadd.f32 0.0, %v879
    %881 = vmatprep.mubr.f32.mxu0 %v72
    %882 = vmatmul.mubr.f32.gmra.mrb[0].mxu0 %v71
    %v883 = vpop.f32.mrb[0].mxu0
    %v884 = vadd.f32 0.0, %v883
    %v885 = vpop.f32.mrb[0].mxu0
    %v886 = vadd.f32 0.0, %v885
    %887 = vmatprep.mubr.f32.mxu0 %v75
    %888 = vmatmul.mubr.f32.gmra.mrb[0].mxu0 %v74
    %v889 = vpop.f32.mrb[0].mxu0
    %v890 = vadd.f32 0.0, %v889
    %v891 = vpop.f32.mrb[0].mxu0
    %v892 = vadd.f32 0.0, %v891
    %893 = vmatprep.mubr.f32.mxu0 %v78
    %894 = vmatmul.mubr.f32.gmra.mrb[0].mxu0 %v77
    %v895 = vpop.f32.mrb[0].mxu0
    %v896 = vadd.f32 0.0, %v895
    %v897 = vpop.f32.mrb[0].mxu0
    %v898 = vadd.f32 0.0, %v897
    %899 = vmatprep.mubr.f32.mxu0 %v81
    %900 = vmatmul.mubr.f32.gmra.mrb[0].mxu0 %v80
    %v901 = vpop.f32.mrb[0].mxu0
    %v902 = vadd.f32 0.0, %v901
    %v903 = vpop.f32.mrb[0].mxu0
    %v904 = vadd.f32 0.0, %v903
    %905 = vmatprep.mubr.f32.mxu0 %v84
    %906 = vmatmul.mubr.f32.gmra.mrb[0].mxu0 %v83
    %v907 = vpop.f32.mrb[0].mxu0
    %v908 = vadd.f32 0.0, %v907
    %v909 = vpop.f32.mrb[0].mxu0
    %v910 = vadd.f32 0.0, %v909
    %911 = vmatprep.mubr.f32.mxu0 %v87
    %912 = vmatmul.mubr.f32.gmra.mrb[0].mxu0 %v86
    %v913 = vpop.f32.mrb[0].mxu0
    %v914 = vadd.f32 0.0, %v913
    %v915 = vpop.f32.mrb[0].mxu0
    %v916 = vadd.f32 0.0, %v915
    %917 = vmatprep.mubr.f32.mxu0 %v90
    %918 = vmatmul.mubr.f32.gmra.mrb[0].mxu0 %v89
    %v919 = vpop.f32.mrb[0].mxu0
    %v920 = vadd.f32 0.0, %v919
    %v921 = vpop.f32.mrb[0].mxu0
    %v922 = vadd.f32 0.0, %v921
    %923 = vmatprep.mubr.f32.mxu0 %v93
    %924 = vmatmul.mubr.f32.gmra.mrb[0].mxu0 %v92
    %v925 = vpop.f32.mrb[0].mxu0
    %v926 = vadd.f32 0.0, %v925
    %v927 = vpop.f32.mrb[0].mxu0
    %v928 = vadd.f32 0.0, %v927
    %929 = vmatprep.mubr.f32.mxu0 %v96
    %930 = vmatmul.mubr.f32.gmra.mrb[0].mxu0 %v95
    %v931 = vpop.f32.mrb[0].mxu0
    %v932 = vadd.f32 0.0, %v931
    %v933 = vpop.f32.mrb[0].mxu0
    %v934 = vadd.f32 0.0, %v933
    %935 = vmatprep.mubr.f32.mxu0 %v99
    %936 = vmatmul.mubr.f32.gmra.mrb[0].mxu0 %v98
    %v937 = vpop.f32.mrb[0].mxu0
    %v938 = vadd.f32 0.0, %v937
    %v939 = vpop.f32.mrb[0].mxu0
    %v940 = vadd.f32 0.0, %v939
    %941 = vmatprep.mubr.f32.mxu0 %v102
    %942 = vmatmul.mubr.f32.gmra.mrb[0].mxu0 %v101
    %v943 = vpop.f32.mrb[0].mxu0
    %v944 = vadd.f32 0.0, %v943
    %v945 = vpop.f32.mrb[0].mxu0
    %v946 = vadd.f32 0.0, %v945
    %947 = vdwg.mxu0
    %948 = vmatprep.subr.mxu0 %v756
    %949 = vmatpush1.msra.mxu0 %v755
    %950 = vmatprep.subr.mxu0 %v758
    %951 = vmatpush1.msra.mxu0 %v757
    %952 = vmatprep.subr.mxu0 %v760
    %953 = vmatpush1.msra.mxu0 %v759
    %954 = vmatprep.subr.mxu0 %v762
    %955 = vmatpush1.msra.mxu0 %v761
    %956 = vmatprep.subr.mxu0 %v764
    %957 = vmatpush1.msra.mxu0 %v763
    %958 = vmatprep.subr.mxu0 %v766
    %959 = vmatpush1.msra.mxu0 %v765
    %960 = vmatprep.subr.mxu0 %v768
    %961 = vmatpush1.msra.mxu0 %v767
    %962 = vmatprep.subr.mxu0 %v770
    %963 = vmatpush1.msra.mxu0 %v769
    %964 = vmatprep.subr.mxu0 %v772
    %965 = vmatpush1.msra.mxu0 %v771
    %966 = vmatprep.subr.mxu0 %v774
    %967 = vmatpush1.msra.mxu0 %v773
    %968 = vmatprep.subr.mxu0 %v776
    %969 = vmatpush1.msra.mxu0 %v775
    %970 = vmatprep.subr.mxu0 %v778
    %971 = vmatpush1.msra.mxu0 %v777
    %972 = vmatprep.subr.mxu0 %v780
    %973 = vmatpush1.msra.mxu0 %v779
    %974 = vmatprep.subr.mxu0 %v782
    %975 = vmatpush1.msra.mxu0 %v781
    %976 = vmatprep.subr.mxu0 %v784
    %977 = vmatpush1.msra.mxu0 %v783
    %978 = vmatprep.subr.mxu0 %v786
    %979 = vmatpush1.msra.mxu0 %v785
    %980 = vmatprep.subr.mxu0 0.0
    %981 = vmatpush1.msra.mxu0 0.0
    %982 = vmatprep.subr.mxu0 0.0
    %983 = vmatpush1.msra.mxu0 0.0
    %984 = vmatprep.subr.mxu0 0.0
    %985 = vmatpush1.msra.mxu0 0.0
    %986 = vmatprep.subr.mxu0 0.0
    %987 = vmatpush1.msra.mxu0 0.0
    %988 = vmatprep.subr.mxu0 0.0
    %989 = vmatpush1.msra.mxu0 0.0
    %990 = vmatprep.subr.mxu0 0.0
    %991 = vmatpush1.msra.mxu0 0.0
    %992 = vmatprep.subr.mxu0 0.0
    %993 = vmatpush1.msra.mxu0 0.0
    %994 = vmatprep.subr.mxu0 0.0
    %995 = vmatpush1.msra.mxu0 0.0
    %996 = vmatprep.subr.mxu0 0.0
    %997 = vmatpush1.msra.mxu0 0.0
    %998 = vmatprep.subr.mxu0 0.0
    %999 = vmatpush1.msra.mxu0 0.0
    %1000 = vmatprep.subr.mxu0 0.0
    %1001 = vmatpush1.msra.mxu0 0.0
    %1002 = vmatprep.subr.mxu0 0.0
    %1003 = vmatpush1.msra.mxu0 0.0
    %1004 = vmatprep.subr.mxu0 0.0
    %1005 = vmatpush1.msra.mxu0 0.0
    %1006 = vmatprep.subr.mxu0 0.0
    %1007 = vmatpush1.msra.mxu0 0.0
    %1008 = vmatprep.subr.mxu0 0.0
    %1009 = vmatpush1.msra.mxu0 0.0
    %1010 = vmatprep.subr.mxu0 0.0
    %1011 = vmatpush1.msra.mxu0 0.0
    %1012 = vmatprep.mubr.f32.mxu0 0.0
    %1013 = vmatmul.mubr.f32.gmra.mrb[0].mxu0 %v58
    %v1014 = vpop.f32.mrb[0].mxu0
    %v1015 = vadd.f32 %v854, %v1014
    %v1016 = vpop.f32.mrb[0].mxu0
    %v1017 = vadd.f32 %v856, %v1016
    %1018 = vmatprep.mubr.f32.mxu0 0.0
    %1019 = vmatmul.mubr.f32.gmra.mrb[0].mxu0 %v61
    %v1020 = vpop.f32.mrb[0].mxu0
    %v1021 = vadd.f32 %v860, %v1020
    %v1022 = vpop.f32.mrb[0].mxu0
    %v1023 = vadd.f32 %v862, %v1022
    %1024 = vmatprep.mubr.f32.mxu0 0.0
    %1025 = vmatmul.mubr.f32.gmra.mrb[0].mxu0 %v64
    %v1026 = vpop.f32.mrb[0].mxu0
    %v1027 = vadd.f32 %v866, %v1026
    %v1028 = vpop.f32.mrb[0].mxu0
    %v1029 = vadd.f32 %v868, %v1028
    %1030 = vmatprep.mubr.f32.mxu0 0.0
    %1031 = vmatmul.mubr.f32.gmra.mrb[0].mxu0 %v67
    %v1032 = vpop.f32.mrb[0].mxu0
    %v1033 = vadd.f32 %v872, %v1032
    %v1034 = vpop.f32.mrb[0].mxu0
    %v1035 = vadd.f32 %v874, %v1034
    %1036 = vmatprep.mubr.f32.mxu0 0.0
    %1037 = vmatmul.mubr.f32.gmra.mrb[0].mxu0 %v70
    %v1038 = vpop.f32.mrb[0].mxu0
    %v1039 = vadd.f32 %v878, %v1038
    %v1040 = vpop.f32.mrb[0].mxu0
    %v1041 = vadd.f32 %v880, %v1040
    %1042 = vmatprep.mubr.f32.mxu0 0.0
    %1043 = vmatmul.mubr.f32.gmra.mrb[0].mxu0 %v73
    %v1044 = vpop.f32.mrb[0].mxu0
    %v1045 = vadd.f32 %v884, %v1044
    %v1046 = vpop.f32.mrb[0].mxu0
    %v1047 = vadd.f32 %v886, %v1046
    %1048 = vmatprep.mubr.f32.mxu0 0.0
    %1049 = vmatmul.mubr.f32.gmra.mrb[0].mxu0 %v76
    %v1050 = vpop.f32.mrb[0].mxu0
    %v1051 = vadd.f32 %v890, %v1050
    %v1052 = vpop.f32.mrb[0].mxu0
    %v1053 = vadd.f32 %v892, %v1052
    %1054 = vmatprep.mubr.f32.mxu0 0.0
    %1055 = vmatmul.mubr.f32.gmra.mrb[0].mxu0 %v79
    %v1056 = vpop.f32.mrb[0].mxu0
    %v1057 = vadd.f32 %v896, %v1056
    %v1058 = vpop.f32.mrb[0].mxu0
    %v1059 = vadd.f32 %v898, %v1058
    %1060 = vmatprep.mubr.f32.mxu0 0.0
    %1061 = vmatmul.mubr.f32.gmra.mrb[0].mxu0 %v82
    %v1062 = vpop.f32.mrb[0].mxu0
    %v1063 = vadd.f32 %v902, %v1062
    %v1064 = vpop.f32.mrb[0].mxu0
    %v1065 = vadd.f32 %v904, %v1064
    %1066 = vmatprep.mubr.f32.mxu0 0.0
    %1067 = vmatmul.mubr.f32.gmra.mrb[0].mxu0 %v85
    %v1068 = vpop.f32.mrb[0].mxu0
    %v1069 = vadd.f32 %v908, %v1068
    %v1070 = vpop.f32.mrb[0].mxu0
    %v1071 = vadd.f32 %v910, %v1070
    %1072 = vmatprep.mubr.f32.mxu0 0.0
    %1073 = vmatmul.mubr.f32.gmra.mrb[0].mxu0 %v88
    %v1074 = vpop.f32.mrb[0].mxu0
    %v1075 = vadd.f32 %v914, %v1074
    %v1076 = vpop.f32.mrb[0].mxu0
    %v1077 = vadd.f32 %v916, %v1076
    %1078 = vmatprep.mubr.f32.mxu0 0.0
    %1079 = vmatmul.mubr.f32.gmra.mrb[0].mxu0 %v91
    %v1080 = vpop.f32.mrb[0].mxu0
    %v1081 = vadd.f32 %v920, %v1080
    %v1082 = vpop.f32.mrb[0].mxu0
    %v1083 = vadd.f32 %v922, %v1082
    %1084 = vmatprep.mubr.f32.mxu0 0.0
    %1085 = vmatmul.mubr.f32.gmra.mrb[0].mxu0 %v94
    %v1086 = vpop.f32.mrb[0].mxu0
    %v1087 = vadd.f32 %v926, %v1086
    %v1088 = vpop.f32.mrb[0].mxu0
    %v1089 = vadd.f32 %v928, %v1088
    %1090 = vmatprep.mubr.f32.mxu0 0.0
    %1091 = vmatmul.mubr.f32.gmra.mrb[0].mxu0 %v97
    %v1092 = vpop.f32.mrb[0].mxu0
    %v1093 = vadd.f32 %v932, %v1092
    %v1094 = vpop.f32.mrb[0].mxu0
    %v1095 = vadd.f32 %v934, %v1094
    %1096 = vmatprep.mubr.f32.mxu0 0.0
    %1097 = vmatmul.mubr.f32.gmra.mrb[0].mxu0 %v100
    %v1098 = vpop.f32.mrb[0].mxu0
    %v1099 = vadd.f32 %v938, %v1098
    %v1100 = vpop.f32.mrb[0].mxu0
    %v1101 = vadd.f32 %v940, %v1100
    %1102 = vmatprep.mubr.f32.mxu0 0.0
    %1103 = vmatmul.mubr.f32.gmra.mrb[0].mxu0 %v103
    %v1104 = vpop.f32.mrb[0].mxu0
    %v1105 = vadd.f32 %v944, %v1104
    %v1106 = vpop.f32.mrb[0].mxu0
    %v1107 = vadd.f32 %v946, %v1106
    %1108 = vdwg.mxu0
    %s1109 = scalar_lea.vmem [#allocation5], 64
    %v1110 = vld [vmem:[%s1109] sm:$0xff]
    %v1111 = vld [vmem:[%s1109 + $0x8] sm:$0xff]
    %v1112 = vld [vmem:[%s1109 + $0x10] sm:$0xff]
    %v1113 = vld [vmem:[%s1109 + $0x18] sm:$0xff]
    %v1114 = vld [vmem:[%s1109 + $0x20] sm:$0xff]
    %v1115 = vld [vmem:[%s1109 + $0x28] sm:$0xff]
    %v1116 = vld [vmem:[%s1109 + $0x30] sm:$0xff]
    %v1117 = vld [vmem:[%s1109 + $0x38] sm:$0xff]
    %v1118 = vmul.f32 %v1039, 0.5
    %v1119 = vmul.f32 %v1041, 0.5
    %v1120 = vmul.f32 %v1045, 0.5
    %v1121 = vmul.f32 %v1047, 0.5
    %v1122 = vmul.f32 %v1051, 0.5
    %v1123 = vmul.f32 %v1053, 0.5
    %v1124 = vmul.f32 %v1057, 0.5
    %v1125 = vmul.f32 %v1059, 0.5
    %v1126 = vtanh.pop %v1118
    %v1127 = vtanh.pop %v1119
    %v1128 = vtanh.pop %v1120
    %v1129 = vtanh.pop %v1121
    %v1130 = vtanh.pop %v1122
    %v1131 = vtanh.pop %v1123
    %v1132 = vtanh.pop %v1124
    %v1133 = vtanh.pop %v1125
    %v1134 = vmul.f32 %v1126, 0.5
    %v1135 = vmul.f32 %v1127, 0.5
    %v1136 = vmul.f32 %v1128, 0.5
    %v1137 = vmul.f32 %v1129, 0.5
    %v1138 = vmul.f32 %v1130, 0.5
    %v1139 = vmul.f32 %v1131, 0.5
    %v1140 = vmul.f32 %v1132, 0.5
    %v1141 = vmul.f32 %v1133, 0.5
    %v1142 = vadd.f32 %v1134, 0.5
    %v1143 = vadd.f32 %v1135, 0.5
    %v1144 = vadd.f32 %v1136, 0.5
    %v1145 = vadd.f32 %v1137, 0.5
    %v1146 = vadd.f32 %v1138, 0.5
    %v1147 = vadd.f32 %v1139, 0.5
    %v1148 = vadd.f32 %v1140, 0.5
    %v1149 = vadd.f32 %v1141, 0.5
    %v1150 = vmul.f32 %v1142, %v1110
    %v1151 = vmul.f32 %v1143, %v1111
    %v1152 = vmul.f32 %v1144, %v1112
    %v1153 = vmul.f32 %v1145, %v1113
    %v1154 = vmul.f32 %v1146, %v1114
    %v1155 = vmul.f32 %v1147, %v1115
    %v1156 = vmul.f32 %v1148, %v1116
    %v1157 = vmul.f32 %v1149, %v1117
    %v1158 = vmul.f32 %v1015, 0.5
    %v1159 = vmul.f32 %v1017, 0.5
    %v1160 = vmul.f32 %v1021, 0.5
    %v1161 = vmul.f32 %v1023, 0.5
    %v1162 = vmul.f32 %v1027, 0.5
    %v1163 = vmul.f32 %v1029, 0.5
    %v1164 = vmul.f32 %v1033, 0.5
    %v1165 = vmul.f32 %v1035, 0.5
    %v1166 = vtanh.pop %v1158
    %v1167 = vtanh.pop %v1159
    %v1168 = vtanh.pop %v1160
    %v1169 = vtanh.pop %v1161
    %v1170 = vtanh.pop %v1162
    %v1171 = vtanh.pop %v1163
    %v1172 = vtanh.pop %v1164
    %v1173 = vtanh.pop %v1165
    %v1174 = vmul.f32 %v1166, 0.5
    %v1175 = vmul.f32 %v1167, 0.5
    %v1176 = vmul.f32 %v1168, 0.5
    %v1177 = vmul.f32 %v1169, 0.5
    %v1178 = vmul.f32 %v1170, 0.5
    %v1179 = vmul.f32 %v1171, 0.5
    %v1180 = vmul.f32 %v1172, 0.5
    %v1181 = vmul.f32 %v1173, 0.5
    %v1182 = vadd.f32 %v1174, 0.5
    %v1183 = vadd.f32 %v1175, 0.5
    %v1184 = vadd.f32 %v1176, 0.5
    %v1185 = vadd.f32 %v1177, 0.5
    %v1186 = vadd.f32 %v1178, 0.5
    %v1187 = vadd.f32 %v1179, 0.5
    %v1188 = vadd.f32 %v1180, 0.5
    %v1189 = vadd.f32 %v1181, 0.5
    %v1190 = vtanh.pop %v1087
    %v1191 = vtanh.pop %v1089
    %v1192 = vtanh.pop %v1093
    %v1193 = vtanh.pop %v1095
    %v1194 = vtanh.pop %v1099
    %v1195 = vtanh.pop %v1101
    %v1196 = vtanh.pop %v1105
    %v1197 = vtanh.pop %v1107
    %v1198 = vmul.f32 %v1182, %v1190
    %v1199 = vmul.f32 %v1183, %v1191
    %v1200 = vmul.f32 %v1184, %v1192
    %v1201 = vmul.f32 %v1185, %v1193
    %v1202 = vmul.f32 %v1186, %v1194
    %v1203 = vmul.f32 %v1187, %v1195
    %v1204 = vmul.f32 %v1188, %v1196
    %v1205 = vmul.f32 %v1189, %v1197
    %v1206 = vadd.f32 %v1150, %v1198
    %v1207 = vadd.f32 %v1151, %v1199
    %v1208 = vadd.f32 %v1152, %v1200
    %v1209 = vadd.f32 %v1153, %v1201
    %v1210 = vadd.f32 %v1154, %v1202
    %v1211 = vadd.f32 %v1155, %v1203
    %v1212 = vadd.f32 %v1156, %v1204
    %v1213 = vadd.f32 %v1157, %v1205
    %v1214 = vmul.f32 %v1063, 0.5
    %v1215 = vmul.f32 %v1065, 0.5
    %v1216 = vmul.f32 %v1069, 0.5
    %v1217 = vmul.f32 %v1071, 0.5
    %v1218 = vmul.f32 %v1075, 0.5
    %v1219 = vmul.f32 %v1077, 0.5
    %v1220 = vmul.f32 %v1081, 0.5
    %v1221 = vmul.f32 %v1083, 0.5
    %v1222 = vtanh.pop %v1214
    %v1223 = vtanh.pop %v1215
    %v1224 = vtanh.pop %v1216
    %v1225 = vtanh.pop %v1217
    %v1226 = vtanh.pop %v1218
    %v1227 = vtanh.pop %v1219
    %v1228 = vtanh.pop %v1220
    %v1229 = vtanh.pop %v1221
    %v1230 = vmul.f32 %v1222, 0.5
    %v1231 = vmul.f32 %v1223, 0.5
    %v1232 = vmul.f32 %v1224, 0.5
    %v1233 = vmul.f32 %v1225, 0.5
    %v1234 = vmul.f32 %v1226, 0.5
    %v1235 = vmul.f32 %v1227, 0.5
    %v1236 = vmul.f32 %v1228, 0.5
    %v1237 = vmul.f32 %v1229, 0.5
    %v1238 = vadd.f32 %v1230, 0.5
    %v1239 = vadd.f32 %v1231, 0.5
    %v1240 = vadd.f32 %v1232, 0.5
    %v1241 = vadd.f32 %v1233, 0.5
    %v1242 = vadd.f32 %v1234, 0.5
    %v1243 = vadd.f32 %v1235, 0.5
    %v1244 = vadd.f32 %v1236, 0.5
    %v1245 = vadd.f32 %v1237, 0.5
    %v1246 = vtanh.pop %v1206
    %v1247 = vtanh.pop %v1207
    %v1248 = vtanh.pop %v1208
    %v1249 = vtanh.pop %v1209
    %v1250 = vtanh.pop %v1210
    %v1251 = vtanh.pop %v1211
    %v1252 = vtanh.pop %v1212
    %v1253 = vtanh.pop %v1213
    %v1254 = vmul.f32 %v1238, %v1246
    %v1255 = vmul.f32 %v1239, %v1247
    %v1256 = vmul.f32 %v1240, %v1248
    %v1257 = vmul.f32 %v1241, %v1249
    %v1258 = vmul.f32 %v1242, %v1250
    %v1259 = vmul.f32 %v1243, %v1251
    %v1260 = vmul.f32 %v1244, %v1252
    %v1261 = vmul.f32 %v1245, %v1253
    %s1262 = scalar_lea.vmem [#allocation8], 128
    %1263 = vst [vmem:[%s1262] sm:$0xff] %v1254
    %1264 = vst [vmem:[%s1262 + $0x8] sm:$0xff] %v1255
    %1265 = vst [vmem:[%s1262 + $0x10] sm:$0xff] %v1256
    %1266 = vst [vmem:[%s1262 + $0x18] sm:$0xff] %v1257
    %1267 = vst [vmem:[%s1262 + $0x20] sm:$0xff] %v1258
    %1268 = vst [vmem:[%s1262 + $0x28] sm:$0xff] %v1259
    %1269 = vst [vmem:[%s1262 + $0x30] sm:$0xff] %v1260
    %1270 = vst [vmem:[%s1262 + $0x38] sm:$0xff] %v1261
    %1271 = vst [vmem:[%s1262 + $0x40] sm:$0xff] %v1206
    %1272 = vst [vmem:[%s1262 + $0x48] sm:$0xff] %v1207
    %1273 = vst [vmem:[%s1262 + $0x50] sm:$0xff] %v1208
    %1274 = vst [vmem:[%s1262 + $0x58] sm:$0xff] %v1209
    %1275 = vst [vmem:[%s1262 + $0x60] sm:$0xff] %v1210
    %1276 = vst [vmem:[%s1262 + $0x68] sm:$0xff] %v1211
    %1277 = vst [vmem:[%s1262 + $0x70] sm:$0xff] %v1212
    %1278 = vst [vmem:[%s1262 + $0x78] sm:$0xff] %v1213
    // Predicated region
    $region26: #{tpu_custom_call.1} parent=1 // pred_check
      _
    $region27: #{tpu_custom_call.1} parent=1 // pred_check_branch
      %1280 = sbr.rel (0) target = $region29
    $region28: #{tpu_custom_call.1} parent=1 // pred_region
      %s1282 = ssub.s32 4096, 4096
      %1283 = vsyncadd [#allocation4], %s1282
      %s1284 = sshll.u32 [#allocation8], 4
      %s1285 = int_to_ptr.vmem [resolvable:$true] %s1284
      %1290 = dma.vmem_to_hbm [thread:$0]  %s1285, 4096, %s3, [#allocation4], 256, 256, 16
    $region29: #{tpu_custom_call.1} parent=1 // pred_fallthru
      _
    // Predicated region
    $region30: #{tpu_custom_call.1} parent=1 // pred_check
      _
    $region31: #{tpu_custom_call.1} parent=1 // pred_check_branch
      %1292 = sbr.rel (0) target = $region33
    $region32: #{tpu_custom_call.1} parent=1 // pred_region
      %1293 = dma.done [#allocation4], 4096
    $region33: #{tpu_custom_call.1} parent=1 // pred_fallthru
      _
    %1294 = vsyncpa [#allocation3], 1
    %1295 = vsyncpa [#allocation6], 1
    %1296 = vsyncpa [#allocation4], 1

</llo_original>
